<compile_context>
chip_gen: v6e
topology: v6e:2x2x1
jax: 0.10.0
libtpu: 0.0.40
codegen_flags: <defaults>
</compile_context>

<pallas_src>
import jax
import jax.numpy as jnp
from jax import lax
from jax.experimental import pallas as pl
from jax.experimental.pallas import tpu as pltpu


_LN_EPS = 1e-6


def _metaformer_block_kernel(sr_ref, x_ref, ln1w_ref, ln2w_ref, w1_ref, w2_ref,
                             o_ref):
    """One fused MetaFormerBlock over a (tm, C) tile of tokens.

    sr_ref:   (2,) f32 SMEM — StarReLU [scale, bias]
    x_ref:    (tm, C)  input tokens
    ln1w_ref: (1, C)   LayerNormWithoutBias weight (norm1)
    ln2w_ref: (1, C)   LayerNormWithoutBias weight (norm2)
    w1_ref:   (C, Ch)  bf16 fc1 weight (no bias)
    w2_ref:   (Ch, C)  bf16 fc2 weight (no bias)
    o_ref:    (tm, C)  output tokens
    """
    x = x_ref[...].astype(jnp.float32)                       # (tm, C)

    # ---- norm1 + identity token mixer + residual (res/layer scale = id) ----
    mu1 = jnp.mean(x, axis=-1, keepdims=True)
    c1 = x - mu1
    v1 = jnp.mean(c1 * c1, axis=-1, keepdims=True)
    n1 = c1 * lax.rsqrt(v1 + _LN_EPS) * ln1w_ref[...].astype(jnp.float32)
    y = x + n1

    # ---- norm2 ----
    mu2 = jnp.mean(y, axis=-1, keepdims=True)
    c2 = y - mu2
    v2 = jnp.mean(c2 * c2, axis=-1, keepdims=True)
    n2 = c2 * lax.rsqrt(v2 + _LN_EPS) * ln2w_ref[...].astype(jnp.float32)

    # ---- Mlp: fc1 (no bias) -> StarReLU -> fc2 (no bias), MXU + f32 acc ----
    h = jnp.dot(n2.astype(w1_ref.dtype), w1_ref[...],
                preferred_element_type=jnp.float32)           # (tm, Ch)
    r = jnp.maximum(h, 0.0)
    a = sr_ref[0] * (r * r) + sr_ref[1]                       # StarReLU
    m = jnp.dot(a.astype(w2_ref.dtype), w2_ref[...],
                preferred_element_type=jnp.float32)           # (tm, C)

    o_ref[...] = (y + m).astype(o_ref.dtype)


def _pick_tile(dim, max_tile, granularity):
    """Largest tile <= max_tile dividing `dim` and a multiple of `granularity`;
    falls back to the full dim (always a legal block size)."""
    if dim <= max_tile:
        return dim
    t = (max_tile // granularity) * granularity
    while t >= granularity:
        if dim % t == 0:
            return t
        t -= granularity
    return dim


def metaformer_block(x_bhwc, ln1_w, ln2_w, fc1_w, fc2_w, sr_scale, sr_bias,
                     *, compute_dtype=jnp.bfloat16):
    """One MetaFormerBlock (identity token mixer, no-bias MLP, eval mode)."""
    B, H, W, C = x_bhwc.shape
    T = B * H * W                       # total tokens
    Ch = fc1_w.shape[1]
    assert fc1_w.shape == (C, Ch) and fc2_w.shape == (Ch, C)
    assert ln1_w.shape == (C,) and ln2_w.shape == (C,)

    x_tok = x_bhwc.reshape(T, C)        # row-major reshape, free

    # Token-row tile: multiple of 8 sublanes (or the full token count).
    tm = _pick_tile(T, 256, 8)
    grid = (T // tm,)

    sr = jnp.stack([jnp.asarray(sr_scale, jnp.float32).reshape(()),
                    jnp.asarray(sr_bias, jnp.float32).reshape(())])      # (2,)

    w1 = fc1_w.astype(compute_dtype)
    w2 = fc2_w.astype(compute_dtype)

    xbytes = jnp.dtype(x_bhwc.dtype).itemsize
    wbytes = jnp.dtype(compute_dtype).itemsize
    vmem_need = (2 * tm * C * xbytes            # double-buffered input tiles
                 + 2 * tm * C * xbytes          # double-buffered output tiles
                 + (C * Ch + Ch * C) * wbytes   # resident MLP weights
                 + tm * Ch * 4 + 2 * tm * C * 4 # in-flight f32 intermediates
                 + 4 * C * 4)                   # LN weights
    vmem_limit = int(min(64 << 20, max(2 * vmem_need, 4 << 20)))

    out_tok = pl.pallas_call(
        _metaformer_block_kernel,
        out_shape=jax.ShapeDtypeStruct((T, C), x_bhwc.dtype),
        grid_spec=pltpu.PrefetchScalarGridSpec(
            num_scalar_prefetch=0,
            grid=grid,
            in_specs=[
                pl.BlockSpec(memory_space=pltpu.MemorySpace.SMEM),  # StarReLU s,b
                pl.BlockSpec((tm, C), lambda i: (i, 0)),            # x tokens
                pl.BlockSpec((1, C), lambda i: (0, 0)),             # ln1 weight
                pl.BlockSpec((1, C), lambda i: (0, 0)),             # ln2 weight
                pl.BlockSpec((C, Ch), lambda i: (0, 0)),            # fc1 weight
                pl.BlockSpec((Ch, C), lambda i: (0, 0)),            # fc2 weight
            ],
            out_specs=pl.BlockSpec((tm, C), lambda i: (i, 0)),
        ),
        compiler_params=pltpu.CompilerParams(
            dimension_semantics=("parallel",),
            vmem_limit_bytes=vmem_limit,
        ),
    )(sr, x_tok, ln1_w.reshape(1, C), ln2_w.reshape(1, C), w1, w2)

    return out_tok.reshape(B, H, W, C)


# ---------------- pure-JAX reference (mirrors the PyTorch forward) ----------
def _layer_norm_nobias(v, w, eps=_LN_EPS):
    mu = v.mean(axis=-1, keepdims=True)
    c = v - mu
    var = (c * c).mean(axis=-1, keepdims=True)
    return c / jnp.sqrt(var + eps) * w


def _ref_block(x_bhwc, ln1_w, ln2_w, fc1_w, fc2_w, s, b):
    x = x_bhwc.astype(jnp.float32)
    y = x + _layer_norm_nobias(x, ln1_w)                  # token mixer = identity
    h = _layer_norm_nobias(y, ln2_w) @ fc1_w
    a = s * jnp.maximum(h, 0.0) ** 2 + b                  # StarReLU
    return (y + a @ fc2_w).astype(x_bhwc.dtype)


if __name__ == "__main__":
    # Stage-0 MetaFormer shapes: dim = 64, mlp_ratio = 4, depth = 2,
    # small spatial grid (H = W = 8 -> 64 tokens per image, batch = 2).
    B, H, W, C = 2, 8, 8, 64
    HIDDEN = 4 * C
    DEPTH = 2

    key = jax.random.PRNGKey(0)
    kx, *kp = jax.random.split(key, 1 + 4 * DEPTH)
    x = jax.random.normal(kx, (B, H, W, C), dtype=jnp.float32)

    params = []
    for d in range(DEPTH):
        k1, k2, k3, k4 = kp[4 * d: 4 * d + 4]
        params.append(dict(
            ln1_w=1.0 + 0.1 * jax.random.normal(k1, (C,), jnp.float32),
            ln2_w=1.0 + 0.1 * jax.random.normal(k2, (C,), jnp.float32),
            fc1_w=0.02 * jax.random.normal(k3, (C, HIDDEN), jnp.float32),
            fc2_w=0.02 * jax.random.normal(k4, (HIDDEN, C), jnp.float32),
            sr_scale=jnp.float32(1.25),
            sr_bias=jnp.float32(0.05),
        ))

    @jax.jit
    def stage(x_in):
        out = x_in
        for p in params:
            out = metaformer_block(out, p["ln1_w"], p["ln2_w"], p["fc1_w"],
                                   p["fc2_w"], p["sr_scale"], p["sr_bias"])
        return out

    y = jax.block_until_ready(stage(x))

    ref = x
    for p in params:
        ref = _ref_block(ref, p["ln1_w"], p["ln2_w"], p["fc1_w"], p["fc2_w"],
                         p["sr_scale"], p["sr_bias"])

    assert y.shape == (B, H, W, C)
    # Tolerance covers bf16 rounding of the MLP operands (f32 accumulation,
    # f32 residual/norm path).
    assert jnp.allclose(y, ref, atol=3e-2, rtol=3e-2), "mismatch vs reference"

    print("KERNEL_OK")
</pallas_src>

<mosaic_0001>
module attributes {stable_mosaic.version = 11 : i64} {
  func.func @_metaformer_block_kernel(%arg0: i32, %arg1: memref<2xf32, #tpu.memory_space<smem>>, %arg2: memref<128x64xf32, #tpu.memory_space<vmem>>, %arg3: memref<1x64xf32, #tpu.memory_space<vmem>>, %arg4: memref<1x64xf32, #tpu.memory_space<vmem>>, %arg5: memref<64x256xbf16, #tpu.memory_space<vmem>>, %arg6: memref<256x64xbf16, #tpu.memory_space<vmem>>, %arg7: memref<128x64xf32, #tpu.memory_space<vmem>>) attributes {dimension_semantics = [#tpu.dimension_semantics<parallel>], iteration_bounds = array<i64: 1>, scalar_prefetch = 0 : i64, scratch_operands = 0 : i64, tpu.core_type = #tpu.core_type<tc>, window_params = [{transform_indices = @transform_0, window_bounds = array<i64: 2>}, {transform_indices = @transform_1, window_bounds = array<i64: 128, 64>}, {pipeline_mode = #tpu.pipeline_mode<synchronous>, transform_indices = @transform_2, window_bounds = array<i64: 1, 64>}, {pipeline_mode = #tpu.pipeline_mode<synchronous>, transform_indices = @transform_3, window_bounds = array<i64: 1, 64>}, {pipeline_mode = #tpu.pipeline_mode<synchronous>, transform_indices = @transform_4, window_bounds = array<i64: 64, 256>}, {pipeline_mode = #tpu.pipeline_mode<synchronous>, transform_indices = @transform_5, window_bounds = array<i64: 256, 64>}, {transform_indices = @transform_6, window_bounds = array<i64: 128, 64>}]} {
    %c0 = arith.constant 0 : index
    %c0_0 = arith.constant 0 : index
    %0 = vector.load %arg2[%c0, %c0_0] : memref<128x64xf32, #tpu.memory_space<vmem>>, vector<128x64xf32>
    %cst = arith.constant dense<0.000000e+00> : vector<128xf32>
    %1 = vector.multi_reduction <add>, %0, %cst [1] : vector<128x64xf32> to vector<128xf32>
    %2 = vector.shape_cast %1 : vector<128xf32> to vector<128x1xf32>
    %cst_1 = arith.constant 6.400000e+01 : f32
    %3 = vector.broadcast %cst_1 : f32 to vector<128x1xf32>
    %4 = arith.divf %2, %3 : vector<128x1xf32>
    %5 = vector.broadcast %4 : vector<128x1xf32> to vector<128x64xf32>
    %6 = arith.subf %0, %5 : vector<128x64xf32>
    %7 = arith.mulf %6, %6 : vector<128x64xf32>
    %cst_2 = arith.constant dense<0.000000e+00> : vector<128xf32>
    %8 = vector.multi_reduction <add>, %7, %cst_2 [1] : vector<128x64xf32> to vector<128xf32>
    %9 = vector.shape_cast %8 : vector<128xf32> to vector<128x1xf32>
    %cst_3 = arith.constant 6.400000e+01 : f32
    %10 = vector.broadcast %cst_3 : f32 to vector<128x1xf32>
    %11 = arith.divf %9, %10 : vector<128x1xf32>
    %cst_4 = arith.constant 9.99999997E-7 : f32
    %12 = vector.broadcast %cst_4 : f32 to vector<128x1xf32>
    %13 = arith.addf %11, %12 : vector<128x1xf32>
    %14 = math.rsqrt %13 : vector<128x1xf32>
    %15 = vector.broadcast %14 : vector<128x1xf32> to vector<128x64xf32>
    %16 = arith.mulf %6, %15 : vector<128x64xf32>
    %c0_5 = arith.constant 0 : index
    %c0_6 = arith.constant 0 : index
    %17 = vector.load %arg3[%c0_5, %c0_6] : memref<1x64xf32, #tpu.memory_space<vmem>>, vector<1x64xf32>
    %18 = vector.broadcast %17 : vector<1x64xf32> to vector<128x64xf32>
    %19 = arith.mulf %16, %18 : vector<128x64xf32>
    %20 = arith.addf %0, %19 : vector<128x64xf32>
    %cst_7 = arith.constant dense<0.000000e+00> : vector<128xf32>
    %21 = vector.multi_reduction <add>, %20, %cst_7 [1] : vector<128x64xf32> to vector<128xf32>
    %22 = vector.shape_cast %21 : vector<128xf32> to vector<128x1xf32>
    %cst_8 = arith.constant 6.400000e+01 : f32
    %23 = vector.broadcast %cst_8 : f32 to vector<128x1xf32>
    %24 = arith.divf %22, %23 : vector<128x1xf32>
    %25 = vector.broadcast %24 : vector<128x1xf32> to vector<128x64xf32>
    %26 = arith.subf %20, %25 : vector<128x64xf32>
    %27 = arith.mulf %26, %26 : vector<128x64xf32>
    %cst_9 = arith.constant dense<0.000000e+00> : vector<128xf32>
    %28 = vector.multi_reduction <add>, %27, %cst_9 [1] : vector<128x64xf32> to vector<128xf32>
    %29 = vector.shape_cast %28 : vector<128xf32> to vector<128x1xf32>
    %cst_10 = arith.constant 6.400000e+01 : f32
    %30 = vector.broadcast %cst_10 : f32 to vector<128x1xf32>
    %31 = arith.divf %29, %30 : vector<128x1xf32>
    %cst_11 = arith.constant 9.99999997E-7 : f32
    %32 = vector.broadcast %cst_11 : f32 to vector<128x1xf32>
    %33 = arith.addf %31, %32 : vector<128x1xf32>
    %34 = math.rsqrt %33 : vector<128x1xf32>
    %35 = vector.broadcast %34 : vector<128x1xf32> to vector<128x64xf32>
    %36 = arith.mulf %26, %35 : vector<128x64xf32>
    %c0_12 = arith.constant 0 : index
    %c0_13 = arith.constant 0 : index
    %37 = vector.load %arg4[%c0_12, %c0_13] : memref<1x64xf32, #tpu.memory_space<vmem>>, vector<1x64xf32>
    %38 = vector.broadcast %37 : vector<1x64xf32> to vector<128x64xf32>
    %39 = arith.mulf %36, %38 : vector<128x64xf32>
    %40 = arith.truncf %39 : vector<128x64xf32> to vector<128x64xbf16>
    %c0_14 = arith.constant 0 : index
    %c0_15 = arith.constant 0 : index
    %41 = vector.load %arg5[%c0_14, %c0_15] : memref<64x256xbf16, #tpu.memory_space<vmem>>, vector<64x256xbf16>
    %cst_16 = arith.constant dense<0.000000e+00> : vector<128x256xf32>
    %42 = tpu.matmul %40, %41, %cst_16 {dimension_numbers = #tpu.dot_dimension_numbers<[1], [0], [0], [1], [0, 0, 1, 1], [], []>} : vector<128x64xbf16>, vector<64x256xbf16>, vector<128x256xf32> -> vector<128x256xf32>
    %cst_17 = arith.constant 0.000000e+00 : f32
    %43 = vector.broadcast %cst_17 : f32 to vector<128x256xf32>
    %44 = arith.maximumf %42, %43 : vector<128x256xf32>
    %c0_18 = arith.constant 0 : index
    %45 = memref.load %arg1[%c0_18] : memref<2xf32, #tpu.memory_space<smem>>
    %46 = arith.mulf %44, %44 : vector<128x256xf32>
    %47 = vector.broadcast %45 : f32 to vector<128x256xf32>
    %48 = arith.mulf %47, %46 : vector<128x256xf32>
    %c1 = arith.constant 1 : index
    %49 = memref.load %arg1[%c1] : memref<2xf32, #tpu.memory_space<smem>>
    %50 = vector.broadcast %49 : f32 to vector<128x256xf32>
    %51 = arith.addf %48, %50 : vector<128x256xf32>
    %52 = arith.truncf %51 : vector<128x256xf32> to vector<128x256xbf16>
    %c0_19 = arith.constant 0 : index
    %c0_20 = arith.constant 0 : index
    %53 = vector.load %arg6[%c0_19, %c0_20] : memref<256x64xbf16, #tpu.memory_space<vmem>>, vector<256x64xbf16>
    %cst_21 = arith.constant dense<0.000000e+00> : vector<128x64xf32>
    %54 = tpu.matmul %52, %53, %cst_21 {dimension_numbers = #tpu.dot_dimension_numbers<[1], [0], [0], [1], [0, 0, 1, 1], [], []>} : vector<128x256xbf16>, vector<256x64xbf16>, vector<128x64xf32> -> vector<128x64xf32>
    %55 = arith.addf %20, %54 : vector<128x64xf32>
    %c0_22 = arith.constant 0 : index
    %c0_23 = arith.constant 0 : index
    %56 = vector.load %arg7[%c0_22, %c0_23] : memref<128x64xf32, #tpu.memory_space<vmem>>, vector<128x64xf32>
    tpu.vector_store %arg7[%c0_22, %c0_23], %55 {strides = array<i32>} : memref<128x64xf32, #tpu.memory_space<vmem>>, vector<128x64xf32>,
    return
  }
  func.func @transform_0(%arg0: i32) -> i32 {
    %c0_i32 = arith.constant 0 : i32
    %c0_i32_0 = arith.constant 0 : i32
    return %c0_i32 : i32
  }
  func.func @transform_1(%arg0: i32) -> (i32, i32) {
    %c0_i32 = arith.constant 0 : i32
    %c0_i32_0 = arith.constant 0 : i32
    return %arg0, %c0_i32 : i32, i32
  }
  func.func @transform_2(%arg0: i32) -> (i32, i32) {
    %c0_i32 = arith.constant 0 : i32
    %c0_i32_0 = arith.constant 0 : i32
    %c0_i32_1 = arith.constant 0 : i32
    return %c0_i32, %c0_i32_0 : i32, i32
  }
  func.func @transform_3(%arg0: i32) -> (i32, i32) {
    %c0_i32 = arith.constant 0 : i32
    %c0_i32_0 = arith.constant 0 : i32
    %c0_i32_1 = arith.constant 0 : i32
    return %c0_i32, %c0_i32_0 : i32, i32
  }
  func.func @transform_4(%arg0: i32) -> (i32, i32) {
    %c0_i32 = arith.constant 0 : i32
    %c0_i32_0 = arith.constant 0 : i32
    %c0_i32_1 = arith.constant 0 : i32
    return %c0_i32, %c0_i32_0 : i32, i32
  }
  func.func @transform_5(%arg0: i32) -> (i32, i32) {
    %c0_i32 = arith.constant 0 : i32
    %c0_i32_0 = arith.constant 0 : i32
    %c0_i32_1 = arith.constant 0 : i32
    return %c0_i32, %c0_i32_0 : i32, i32
  }
  func.func @transform_6(%arg0: i32) -> (i32, i32) {
    %c0_i32 = arith.constant 0 : i32
    %c0_i32_0 = arith.constant 0 : i32
    return %arg0, %c0_i32 : i32, i32
  }
}

module attributes {stable_mosaic.version = 11 : i64} {
  func.func @_metaformer_block_kernel(%arg0: i32, %arg1: memref<2xf32, #tpu.memory_space<smem>>, %arg2: memref<128x64xf32, #tpu.memory_space<vmem>>, %arg3: memref<1x64xf32, #tpu.memory_space<vmem>>, %arg4: memref<1x64xf32, #tpu.memory_space<vmem>>, %arg5: memref<64x256xbf16, #tpu.memory_space<vmem>>, %arg6: memref<256x64xbf16, #tpu.memory_space<vmem>>, %arg7: memref<128x64xf32, #tpu.memory_space<vmem>>) attributes {dimension_semantics = [#tpu.dimension_semantics<parallel>], iteration_bounds = array<i64: 1>, scalar_prefetch = 0 : i64, scratch_operands = 0 : i64, tpu.core_type = #tpu.core_type<tc>, window_params = [{transform_indices = @transform_0, window_bounds = array<i64: 2>}, {transform_indices = @transform_1, window_bounds = array<i64: 128, 64>}, {pipeline_mode = #tpu.pipeline_mode<synchronous>, transform_indices = @transform_2, window_bounds = array<i64: 1, 64>}, {pipeline_mode = #tpu.pipeline_mode<synchronous>, transform_indices = @transform_3, window_bounds = array<i64: 1, 64>}, {pipeline_mode = #tpu.pipeline_mode<synchronous>, transform_indices = @transform_4, window_bounds = array<i64: 64, 256>}, {pipeline_mode = #tpu.pipeline_mode<synchronous>, transform_indices = @transform_5, window_bounds = array<i64: 256, 64>}, {transform_indices = @transform_6, window_bounds = array<i64: 128, 64>}]} {
    %c0 = arith.constant 0 : index
    %c0_0 = arith.constant 0 : index
    %0 = vector.load %arg2[%c0, %c0_0] : memref<128x64xf32, #tpu.memory_space<vmem>>, vector<128x64xf32>
    %cst = arith.constant dense<0.000000e+00> : vector<128xf32>
    %1 = vector.multi_reduction <add>, %0, %cst [1] : vector<128x64xf32> to vector<128xf32>
    %2 = vector.shape_cast %1 : vector<128xf32> to vector<128x1xf32>
    %cst_1 = arith.constant 6.400000e+01 : f32
    %3 = vector.broadcast %cst_1 : f32 to vector<128x1xf32>
    %4 = arith.divf %2, %3 : vector<128x1xf32>
    %5 = vector.broadcast %4 : vector<128x1xf32> to vector<128x64xf32>
    %6 = arith.subf %0, %5 : vector<128x64xf32>
    %7 = arith.mulf %6, %6 : vector<128x64xf32>
    %cst_2 = arith.constant dense<0.000000e+00> : vector<128xf32>
    %8 = vector.multi_reduction <add>, %7, %cst_2 [1] : vector<128x64xf32> to vector<128xf32>
    %9 = vector.shape_cast %8 : vector<128xf32> to vector<128x1xf32>
    %cst_3 = arith.constant 6.400000e+01 : f32
    %10 = vector.broadcast %cst_3 : f32 to vector<128x1xf32>
    %11 = arith.divf %9, %10 : vector<128x1xf32>
    %cst_4 = arith.constant 9.99999997E-7 : f32
    %12 = vector.broadcast %cst_4 : f32 to vector<128x1xf32>
    %13 = arith.addf %11, %12 : vector<128x1xf32>
    %14 = math.rsqrt %13 : vector<128x1xf32>
    %15 = vector.broadcast %14 : vector<128x1xf32> to vector<128x64xf32>
    %16 = arith.mulf %6, %15 : vector<128x64xf32>
    %c0_5 = arith.constant 0 : index
    %c0_6 = arith.constant 0 : index
    %17 = vector.load %arg3[%c0_5, %c0_6] : memref<1x64xf32, #tpu.memory_space<vmem>>, vector<1x64xf32>
    %18 = vector.broadcast %17 : vector<1x64xf32> to vector<128x64xf32>
    %19 = arith.mulf %16, %18 : vector<128x64xf32>
    %20 = arith.addf %0, %19 : vector<128x64xf32>
    %cst_7 = arith.constant dense<0.000000e+00> : vector<128xf32>
    %21 = vector.multi_reduction <add>, %20, %cst_7 [1] : vector<128x64xf32> to vector<128xf32>
    %22 = vector.shape_cast %21 : vector<128xf32> to vector<128x1xf32>
    %cst_8 = arith.constant 6.400000e+01 : f32
    %23 = vector.broadcast %cst_8 : f32 to vector<128x1xf32>
    %24 = arith.divf %22, %23 : vector<128x1xf32>
    %25 = vector.broadcast %24 : vector<128x1xf32> to vector<128x64xf32>
    %26 = arith.subf %20, %25 : vector<128x64xf32>
    %27 = arith.mulf %26, %26 : vector<128x64xf32>
    %cst_9 = arith.constant dense<0.000000e+00> : vector<128xf32>
    %28 = vector.multi_reduction <add>, %27, %cst_9 [1] : vector<128x64xf32> to vector<128xf32>
    %29 = vector.shape_cast %28 : vector<128xf32> to vector<128x1xf32>
    %cst_10 = arith.constant 6.400000e+01 : f32
    %30 = vector.broadcast %cst_10 : f32 to vector<128x1xf32>
    %31 = arith.divf %29, %30 : vector<128x1xf32>
    %cst_11 = arith.constant 9.99999997E-7 : f32
    %32 = vector.broadcast %cst_11 : f32 to vector<128x1xf32>
    %33 = arith.addf %31, %32 : vector<128x1xf32>
    %34 = math.rsqrt %33 : vector<128x1xf32>
    %35 = vector.broadcast %34 : vector<128x1xf32> to vector<128x64xf32>
    %36 = arith.mulf %26, %35 : vector<128x64xf32>
    %c0_12 = arith.constant 0 : index
    %c0_13 = arith.constant 0 : index
    %37 = vector.load %arg4[%c0_12, %c0_13] : memref<1x64xf32, #tpu.memory_space<vmem>>, vector<1x64xf32>
    %38 = vector.broadcast %37 : vector<1x64xf32> to vector<128x64xf32>
    %39 = arith.mulf %36, %38 : vector<128x64xf32>
    %40 = arith.truncf %39 : vector<128x64xf32> to vector<128x64xbf16>
    %c0_14 = arith.constant 0 : index
    %c0_15 = arith.constant 0 : index
    %41 = vector.load %arg5[%c0_14, %c0_15] : memref<64x256xbf16, #tpu.memory_space<vmem>>, vector<64x256xbf16>
    %cst_16 = arith.constant dense<0.000000e+00> : vector<128x256xf32>
    %42 = tpu.matmul %40, %41, %cst_16 {dimension_numbers = #tpu.dot_dimension_numbers<[1], [0], [0], [1], [0, 0, 1, 1], [], []>} : vector<128x64xbf16>, vector<64x256xbf16>, vector<128x256xf32> -> vector<128x256xf32>
    %cst_17 = arith.constant 0.000000e+00 : f32
    %43 = vector.broadcast %cst_17 : f32 to vector<128x256xf32>
    %44 = arith.maximumf %42, %43 : vector<128x256xf32>
    %c0_18 = arith.constant 0 : index
    %45 = memref.load %arg1[%c0_18] : memref<2xf32, #tpu.memory_space<smem>>
    %46 = arith.mulf %44, %44 : vector<128x256xf32>
    %47 = vector.broadcast %45 : f32 to vector<128x256xf32>
    %48 = arith.mulf %47, %46 : vector<128x256xf32>
    %c1 = arith.constant 1 : index
    %49 = memref.load %arg1[%c1] : memref<2xf32, #tpu.memory_space<smem>>
    %50 = vector.broadcast %49 : f32 to vector<128x256xf32>
    %51 = arith.addf %48, %50 : vector<128x256xf32>
    %52 = arith.truncf %51 : vector<128x256xf32> to vector<128x256xbf16>
    %c0_19 = arith.constant 0 : index
    %c0_20 = arith.constant 0 : index
    %53 = vector.load %arg6[%c0_19, %c0_20] : memref<256x64xbf16, #tpu.memory_space<vmem>>, vector<256x64xbf16>
    %cst_21 = arith.constant dense<0.000000e+00> : vector<128x64xf32>
    %54 = tpu.matmul %52, %53, %cst_21 {dimension_numbers = #tpu.dot_dimension_numbers<[1], [0], [0], [1], [0, 0, 1, 1], [], []>} : vector<128x256xbf16>, vector<256x64xbf16>, vector<128x64xf32> -> vector<128x64xf32>
    %55 = arith.addf %20, %54 : vector<128x64xf32>
    %c0_22 = arith.constant 0 : index
    %c0_23 = arith.constant 0 : index
    %56 = vector.load %arg7[%c0_22, %c0_23] : memref<128x64xf32, #tpu.memory_space<vmem>>, vector<128x64xf32>
    tpu.vector_store %arg7[%c0_22, %c0_23], %55 {strides = array<i32>} : memref<128x64xf32, #tpu.memory_space<vmem>>, vector<128x64xf32>,
    return
  }
  func.func @transform_0(%arg0: i32) -> i32 {
    %c0_i32 = arith.constant 0 : i32
    %c0_i32_0 = arith.constant 0 : i32
    return %c0_i32 : i32
  }
  func.func @transform_1(%arg0: i32) -> (i32, i32) {
    %c0_i32 = arith.constant 0 : i32
    %c0_i32_0 = arith.constant 0 : i32
    return %arg0, %c0_i32 : i32, i32
  }
  func.func @transform_2(%arg0: i32) -> (i32, i32) {
    %c0_i32 = arith.constant 0 : i32
    %c0_i32_0 = arith.constant 0 : i32
    %c0_i32_1 = arith.constant 0 : i32
    return %c0_i32, %c0_i32_0 : i32, i32
  }
  func.func @transform_3(%arg0: i32) -> (i32, i32) {
    %c0_i32 = arith.constant 0 : i32
    %c0_i32_0 = arith.constant 0 : i32
    %c0_i32_1 = arith.constant 0 : i32
    return %c0_i32, %c0_i32_0 : i32, i32
  }
  func.func @transform_4(%arg0: i32) -> (i32, i32) {
    %c0_i32 = arith.constant 0 : i32
    %c0_i32_0 = arith.constant 0 : i32
    %c0_i32_1 = arith.constant 0 : i32
    return %c0_i32, %c0_i32_0 : i32, i32
  }
  func.func @transform_5(%arg0: i32) -> (i32, i32) {
    %c0_i32 = arith.constant 0 : i32
    %c0_i32_0 = arith.constant 0 : i32
    %c0_i32_1 = arith.constant 0 : i32
    return %c0_i32, %c0_i32_0 : i32, i32
  }
  func.func @transform_6(%arg0: i32) -> (i32, i32) {
    %c0_i32 = arith.constant 0 : i32
    %c0_i32_0 = arith.constant 0 : i32
    return %arg0, %c0_i32 : i32, i32
  }
}

</mosaic_0001>

<llo_original>
// kernel: stage.3
$region0: #{stage.3}
  #allocation0 [shape = 'u32[]', space=smem, size = 0x4, offset = 0x4, fixed_abs, tag = 'smem constant byte address 0x4 - core index']
  #allocation1 [shape = 'u32[144,128]{1,0:T(1,128)}', space=vmem, size = 0x12000, scoped, tag = 'internal scratch']
  %s0 = inlined_call_operand.vmem [shape: f32[2], index: 0, kind: input, shape index: {}]
  %s1 = inlined_call_operand.vmem [shape: f32[128,64], index: 1, kind: input, shape index: {}]
  %s2 = inlined_call_operand.vmem [shape: f32[1,64], index: 2, kind: input, shape index: {}]
  %s3 = inlined_call_operand.vmem [shape: f32[1,64], index: 3, kind: input, shape index: {}]
  %s4 = inlined_call_operand.vmem [shape: bf16[64,256], index: 4, kind: input, shape index: {}]
  %s5 = inlined_call_operand.vmem [shape: bf16[256,64], index: 5, kind: input, shape index: {}]
  %s6 = inlined_call_operand.hbm [shape: f32[128,64], index: 6, kind: output, shape index: {}]
  %s7 = sld [smem:[#allocation0]]
  $region38: #{stage.3} parent=0
    _
  %s9 = ssub.s32 1, %s7
  %s10 = scalar_select 0, %s9, %s7
  $region1: #{stage.3} parent=0
    #allocation2 [shape = 'u8[512]{0}', space=smem, size = 0x200, scoped, tag = 'input window, operand 0, single buffered']
    #allocation3 [shape = 's32[1]{0}', space=sflag, size = 0x4, scoped, tag = 'scoped memory for stage.3']
    #allocation4 [shape = 's32[1]{0}', space=sflag, size = 0x4, scoped, tag = 'scoped memory for stage.3']
    #allocation5 [shape = 'u8[65536]{0}', space=vmem, size = 0x10000, scoped, tag = 'output window, operand 0, single buffered']
    %11 = vsyncpa [#allocation4], 0
    %12 = vsyncpa [#allocation3], 0
    // Predicated region
    $region2: #{stage.3} parent=1 // pred_check
      _
    $region3: #{stage.3} parent=1 // pred_check_branch
      %14 = sbr.rel (0) target = $region5
    $region4: #{stage.3} parent=1 // pred_region
      %s16 = ssub.s32 16, 16
      %17 = vsyncadd [#allocation4], %s16
      %s19 = sshll.u32 %s0, 4
      %s20 = int_to_ptr.vmem [resolvable:$true] %s19
      %22 = dma.vmem_to_smem %s20, 16, [#allocation2], [#allocation4]
    $region5: #{stage.3} parent=1 // pred_fallthru
      _
    // Predicated region
    $region6: #{stage.3} parent=1 // pred_check
      _
    $region7: #{stage.3} parent=1 // pred_check_branch
      %24 = sbr.rel (0) target = $region9
    $region8: #{stage.3} parent=1 // pred_region
      _
    $region9: #{stage.3} parent=1 // pred_fallthru
      _
    // Predicated region
    $region10: #{stage.3} parent=1 // pred_check
      _
    $region11: #{stage.3} parent=1 // pred_check_branch
      %26 = sbr.rel (0) target = $region13
    $region12: #{stage.3} parent=1 // pred_region
      _
    $region13: #{stage.3} parent=1 // pred_fallthru
      _
    // Predicated region
    $region14: #{stage.3} parent=1 // pred_check
      _
    $region15: #{stage.3} parent=1 // pred_check_branch
      %28 = sbr.rel (0) target = $region17
    $region16: #{stage.3} parent=1 // pred_region
      _
    $region17: #{stage.3} parent=1 // pred_fallthru
      _
    // Predicated region
    $region18: #{stage.3} parent=1 // pred_check
      _
    $region19: #{stage.3} parent=1 // pred_check_branch
      %30 = sbr.rel (0) target = $region21
    $region20: #{stage.3} parent=1 // pred_region
      _
    $region21: #{stage.3} parent=1 // pred_fallthru
      _
    // Predicated region
    $region22: #{stage.3} parent=1 // pred_check
      _
    $region23: #{stage.3} parent=1 // pred_check_branch
      %32 = sbr.rel (0) target = $region25
    $region24: #{stage.3} parent=1 // pred_region
      _
    $region25: #{stage.3} parent=1 // pred_fallthru
      _
    // Predicated region
    $region26: #{stage.3} parent=1 // pred_check
      _
    $region27: #{stage.3} parent=1 // pred_check_branch
      %34 = sbr.rel (0) target = $region29
    $region28: #{stage.3} parent=1 // pred_region
      %35 = dma.done [#allocation4], 16
    $region29: #{stage.3} parent=1 // pred_fallthru
      _
    %36 = sfence
    %v38 = vld [vmem:[%s1] sm:$0xff]
    %v39 = vld [vmem:[%s1 + $0x8] sm:$0xff]
    %v40 = vld [vmem:[%s1 + $0x10] sm:$0xff]
    %v41 = vld [vmem:[%s1 + $0x18] sm:$0xff]
    %v42 = vld [vmem:[%s1 + $0x20] sm:$0xff]
    %v43 = vld [vmem:[%s1 + $0x28] sm:$0xff]
    %v44 = vld [vmem:[%s1 + $0x30] sm:$0xff]
    %v45 = vld [vmem:[%s1 + $0x38] sm:$0xff]
    %v46 = vld [vmem:[%s1 + $0x40] sm:$0xff]
    %v47 = vld [vmem:[%s1 + $0x48] sm:$0xff]
    %v48 = vld [vmem:[%s1 + $0x50] sm:$0xff]
    %v49 = vld [vmem:[%s1 + $0x58] sm:$0xff]
    %v50 = vld [vmem:[%s1 + $0x60] sm:$0xff]
    %v51 = vld [vmem:[%s1 + $0x68] sm:$0xff]
    %v52 = vld [vmem:[%s1 + $0x70] sm:$0xff]
    %v53 = vld [vmem:[%s1 + $0x78] sm:$0xff]
    %vm54 = vcmask 523264
    %v55 = vsel %vm54, %v38, 0.0
    %56 = vadd.xlane.f32.xlu0 %v55
    %v57 = vpop.xlane.xlu0 %56
    %v58 = vsel %vm54, %v39, 0.0
    %59 = vadd.xlane.f32.xlu0 %v58
    %v60 = vpop.xlane.xlu0 %59
    %v61 = vsel %vm54, %v40, 0.0
    %62 = vadd.xlane.f32.xlu0 %v61
    %v63 = vpop.xlane.xlu0 %62
    %v64 = vsel %vm54, %v41, 0.0
    %65 = vadd.xlane.f32.xlu0 %v64
    %v66 = vpop.xlane.xlu0 %65
    %v67 = vsel %vm54, %v42, 0.0
    %68 = vadd.xlane.f32.xlu0 %v67
    %v69 = vpop.xlane.xlu0 %68
    %v70 = vsel %vm54, %v43, 0.0
    %71 = vadd.xlane.f32.xlu0 %v70
    %v72 = vpop.xlane.xlu0 %71
    %v73 = vsel %vm54, %v44, 0.0
    %74 = vadd.xlane.f32.xlu0 %v73
    %v75 = vpop.xlane.xlu0 %74
    %v76 = vsel %vm54, %v45, 0.0
    %77 = vadd.xlane.f32.xlu0 %v76
    %v78 = vpop.xlane.xlu0 %77
    %v79 = vsel %vm54, %v46, 0.0
    %80 = vadd.xlane.f32.xlu0 %v79
    %v81 = vpop.xlane.xlu0 %80
    %v82 = vsel %vm54, %v47, 0.0
    %83 = vadd.xlane.f32.xlu0 %v82
    %v84 = vpop.xlane.xlu0 %83
    %v85 = vsel %vm54, %v48, 0.0
    %86 = vadd.xlane.f32.xlu0 %v85
    %v87 = vpop.xlane.xlu0 %86
    %v88 = vsel %vm54, %v49, 0.0
    %89 = vadd.xlane.f32.xlu0 %v88
    %v90 = vpop.xlane.xlu0 %89
    %v91 = vsel %vm54, %v50, 0.0
    %92 = vadd.xlane.f32.xlu0 %v91
    %v93 = vpop.xlane.xlu0 %92
    %v94 = vsel %vm54, %v51, 0.0
    %95 = vadd.xlane.f32.xlu0 %v94
    %v96 = vpop.xlane.xlu0 %95
    %v97 = vsel %vm54, %v52, 0.0
    %98 = vadd.xlane.f32.xlu0 %v97
    %v99 = vpop.xlane.xlu0 %98
    %v100 = vsel %vm54, %v53, 0.0
    %101 = vadd.xlane.f32.xlu0 %v100
    %v102 = vpop.xlane.xlu0 %101
    %v103 = vrcp.pop 64.0
    %v104 = vmul.f32 %v57, %v103
    %v105 = vmul.f32 %v60, %v103
    %v106 = vmul.f32 %v63, %v103
    %v107 = vmul.f32 %v66, %v103
    %v108 = vmul.f32 %v69, %v103
    %v109 = vmul.f32 %v72, %v103
    %v110 = vmul.f32 %v75, %v103
    %v111 = vmul.f32 %v78, %v103
    %v112 = vmul.f32 %v81, %v103
    %v113 = vmul.f32 %v84, %v103
    %v114 = vmul.f32 %v87, %v103
    %v115 = vmul.f32 %v90, %v103
    %v116 = vmul.f32 %v93, %v103
    %v117 = vmul.f32 %v96, %v103
    %v118 = vmul.f32 %v99, %v103
    %v119 = vmul.f32 %v102, %v103
    %v120 = vsub.f32 %v38, %v104
    %v121 = vsub.f32 %v39, %v105
    %v122 = vsub.f32 %v40, %v106
    %v123 = vsub.f32 %v41, %v107
    %v124 = vsub.f32 %v42, %v108
    %v125 = vsub.f32 %v43, %v109
    %v126 = vsub.f32 %v44, %v110
    %v127 = vsub.f32 %v45, %v111
    %v128 = vsub.f32 %v46, %v112
    %v129 = vsub.f32 %v47, %v113
    %v130 = vsub.f32 %v48, %v114
    %v131 = vsub.f32 %v49, %v115
    %v132 = vsub.f32 %v50, %v116
    %v133 = vsub.f32 %v51, %v117
    %v134 = vsub.f32 %v52, %v118
    %v135 = vsub.f32 %v53, %v119
    %v136 = vmul.f32 %v120, %v120
    %v137 = vmul.f32 %v121, %v121
    %v138 = vmul.f32 %v122, %v122
    %v139 = vmul.f32 %v123, %v123
    %v140 = vmul.f32 %v124, %v124
    %v141 = vmul.f32 %v125, %v125
    %v142 = vmul.f32 %v126, %v126
    %v143 = vmul.f32 %v127, %v127
    %v144 = vmul.f32 %v128, %v128
    %v145 = vmul.f32 %v129, %v129
    %v146 = vmul.f32 %v130, %v130
    %v147 = vmul.f32 %v131, %v131
    %v148 = vmul.f32 %v132, %v132
    %v149 = vmul.f32 %v133, %v133
    %v150 = vmul.f32 %v134, %v134
    %v151 = vmul.f32 %v135, %v135
    %v152 = vsel %vm54, %v136, 0.0
    %153 = vadd.xlane.f32.xlu0 %v152
    %v154 = vpop.xlane.xlu0 %153
    %v155 = vsel %vm54, %v137, 0.0
    %156 = vadd.xlane.f32.xlu0 %v155
    %v157 = vpop.xlane.xlu0 %156
    %v158 = vsel %vm54, %v138, 0.0
    %159 = vadd.xlane.f32.xlu0 %v158
    %v160 = vpop.xlane.xlu0 %159
    %v161 = vsel %vm54, %v139, 0.0
    %162 = vadd.xlane.f32.xlu0 %v161
    %v163 = vpop.xlane.xlu0 %162
    %v164 = vsel %vm54, %v140, 0.0
    %165 = vadd.xlane.f32.xlu0 %v164
    %v166 = vpop.xlane.xlu0 %165
    %v167 = vsel %vm54, %v141, 0.0
    %168 = vadd.xlane.f32.xlu0 %v167
    %v169 = vpop.xlane.xlu0 %168
    %v170 = vsel %vm54, %v142, 0.0
    %171 = vadd.xlane.f32.xlu0 %v170
    %v172 = vpop.xlane.xlu0 %171
    %v173 = vsel %vm54, %v143, 0.0
    %174 = vadd.xlane.f32.xlu0 %v173
    %v175 = vpop.xlane.xlu0 %174
    %v176 = vsel %vm54, %v144, 0.0
    %177 = vadd.xlane.f32.xlu0 %v176
    %v178 = vpop.xlane.xlu0 %177
    %v179 = vsel %vm54, %v145, 0.0
    %180 = vadd.xlane.f32.xlu0 %v179
    %v181 = vpop.xlane.xlu0 %180
    %v182 = vsel %vm54, %v146, 0.0
    %183 = vadd.xlane.f32.xlu0 %v182
    %v184 = vpop.xlane.xlu0 %183
    %v185 = vsel %vm54, %v147, 0.0
    %186 = vadd.xlane.f32.xlu0 %v185
    %v187 = vpop.xlane.xlu0 %186
    %v188 = vsel %vm54, %v148, 0.0
    %189 = vadd.xlane.f32.xlu0 %v188
    %v190 = vpop.xlane.xlu0 %189
    %v191 = vsel %vm54, %v149, 0.0
    %192 = vadd.xlane.f32.xlu0 %v191
    %v193 = vpop.xlane.xlu0 %192
    %v194 = vsel %vm54, %v150, 0.0
    %195 = vadd.xlane.f32.xlu0 %v194
    %v196 = vpop.xlane.xlu0 %195
    %v197 = vsel %vm54, %v151, 0.0
    %198 = vadd.xlane.f32.xlu0 %v197
    %v199 = vpop.xlane.xlu0 %198
    %v200 = vmul.f32 %v154, %v103
    %v201 = vmul.f32 %v157, %v103
    %v202 = vmul.f32 %v160, %v103
    %v203 = vmul.f32 %v163, %v103
    %v204 = vmul.f32 %v166, %v103
    %v205 = vmul.f32 %v169, %v103
    %v206 = vmul.f32 %v172, %v103
    %v207 = vmul.f32 %v175, %v103
    %v208 = vmul.f32 %v178, %v103
    %v209 = vmul.f32 %v181, %v103
    %v210 = vmul.f32 %v184, %v103
    %v211 = vmul.f32 %v187, %v103
    %v212 = vmul.f32 %v190, %v103
    %v213 = vmul.f32 %v193, %v103
    %v214 = vmul.f32 %v196, %v103
    %v215 = vmul.f32 %v199, %v103
    %v216 = vadd.f32 %v200, 1e-06
    %v217 = vadd.f32 %v201, 1e-06
    %v218 = vadd.f32 %v202, 1e-06
    %v219 = vadd.f32 %v203, 1e-06
    %v220 = vadd.f32 %v204, 1e-06
    %v221 = vadd.f32 %v205, 1e-06
    %v222 = vadd.f32 %v206, 1e-06
    %v223 = vadd.f32 %v207, 1e-06
    %v224 = vadd.f32 %v208, 1e-06
    %v225 = vadd.f32 %v209, 1e-06
    %v226 = vadd.f32 %v210, 1e-06
    %v227 = vadd.f32 %v211, 1e-06
    %v228 = vadd.f32 %v212, 1e-06
    %v229 = vadd.f32 %v213, 1e-06
    %v230 = vadd.f32 %v214, 1e-06
    %v231 = vadd.f32 %v215, 1e-06
    %v232 = vrsqrt.pop %v216
    %v233 = vrsqrt.pop %v217
    %v234 = vrsqrt.pop %v218
    %v235 = vrsqrt.pop %v219
    %v236 = vrsqrt.pop %v220
    %v237 = vrsqrt.pop %v221
    %v238 = vrsqrt.pop %v222
    %v239 = vrsqrt.pop %v223
    %v240 = vrsqrt.pop %v224
    %v241 = vrsqrt.pop %v225
    %v242 = vrsqrt.pop %v226
    %v243 = vrsqrt.pop %v227
    %v244 = vrsqrt.pop %v228
    %v245 = vrsqrt.pop %v229
    %v246 = vrsqrt.pop %v230
    %v247 = vrsqrt.pop %v231
    %v248 = vmul.f32 %v120, %v232
    %v249 = vmul.f32 %v121, %v233
    %v250 = vmul.f32 %v122, %v234
    %v251 = vmul.f32 %v123, %v235
    %v252 = vmul.f32 %v124, %v236
    %v253 = vmul.f32 %v125, %v237
    %v254 = vmul.f32 %v126, %v238
    %v255 = vmul.f32 %v127, %v239
    %v256 = vmul.f32 %v128, %v240
    %v257 = vmul.f32 %v129, %v241
    %v258 = vmul.f32 %v130, %v242
    %v259 = vmul.f32 %v131, %v243
    %v260 = vmul.f32 %v132, %v244
    %v261 = vmul.f32 %v133, %v245
    %v262 = vmul.f32 %v134, %v246
    %v263 = vmul.f32 %v135, %v247
    %v264 = vld [vmem:[%s2] sm:$0x1]
    %v266 = vlaneseq
    %v267 = vshrl.u32 %v266, 7
    %v268 = vsub.s32 0, %v267
    %v269 = vrot.slane %v264, %v268
    %v271 = vmul.f32 %v248, %v269
    %v272 = vmul.f32 %v249, %v269
    %v273 = vmul.f32 %v250, %v269
    %v274 = vmul.f32 %v251, %v269
    %v275 = vmul.f32 %v252, %v269
    %v276 = vmul.f32 %v253, %v269
    %v277 = vmul.f32 %v254, %v269
    %v278 = vmul.f32 %v255, %v269
    %v279 = vmul.f32 %v256, %v269
    %v280 = vmul.f32 %v257, %v269
    %v281 = vmul.f32 %v258, %v269
    %v282 = vmul.f32 %v259, %v269
    %v283 = vmul.f32 %v260, %v269
    %v284 = vmul.f32 %v261, %v269
    %v285 = vmul.f32 %v262, %v269
    %v286 = vmul.f32 %v263, %v269
    %v287 = vadd.f32 %v38, %v271
    %v288 = vadd.f32 %v39, %v272
    %v289 = vadd.f32 %v40, %v273
    %v290 = vadd.f32 %v41, %v274
    %v291 = vadd.f32 %v42, %v275
    %v292 = vadd.f32 %v43, %v276
    %v293 = vadd.f32 %v44, %v277
    %v294 = vadd.f32 %v45, %v278
    %v295 = vadd.f32 %v46, %v279
    %v296 = vadd.f32 %v47, %v280
    %v297 = vadd.f32 %v48, %v281
    %v298 = vadd.f32 %v49, %v282
    %v299 = vadd.f32 %v50, %v283
    %v300 = vadd.f32 %v51, %v284
    %v301 = vadd.f32 %v52, %v285
    %v302 = vadd.f32 %v53, %v286
    %v303 = vsel %vm54, %v287, 0.0
    %304 = vadd.xlane.f32.xlu0 %v303
    %v305 = vpop.xlane.xlu0 %304
    %v306 = vsel %vm54, %v288, 0.0
    %307 = vadd.xlane.f32.xlu0 %v306
    %v308 = vpop.xlane.xlu0 %307
    %v309 = vsel %vm54, %v289, 0.0
    %310 = vadd.xlane.f32.xlu0 %v309
    %v311 = vpop.xlane.xlu0 %310
    %v312 = vsel %vm54, %v290, 0.0
    %313 = vadd.xlane.f32.xlu0 %v312
    %v314 = vpop.xlane.xlu0 %313
    %v315 = vsel %vm54, %v291, 0.0
    %316 = vadd.xlane.f32.xlu0 %v315
    %v317 = vpop.xlane.xlu0 %316
    %v318 = vsel %vm54, %v292, 0.0
    %319 = vadd.xlane.f32.xlu0 %v318
    %v320 = vpop.xlane.xlu0 %319
    %v321 = vsel %vm54, %v293, 0.0
    %322 = vadd.xlane.f32.xlu0 %v321
    %v323 = vpop.xlane.xlu0 %322
    %v324 = vsel %vm54, %v294, 0.0
    %325 = vadd.xlane.f32.xlu0 %v324
    %v326 = vpop.xlane.xlu0 %325
    %v327 = vsel %vm54, %v295, 0.0
    %328 = vadd.xlane.f32.xlu0 %v327
    %v329 = vpop.xlane.xlu0 %328
    %v330 = vsel %vm54, %v296, 0.0
    %331 = vadd.xlane.f32.xlu0 %v330
    %v332 = vpop.xlane.xlu0 %331
    %v333 = vsel %vm54, %v297, 0.0
    %334 = vadd.xlane.f32.xlu0 %v333
    %v335 = vpop.xlane.xlu0 %334
    %v336 = vsel %vm54, %v298, 0.0
    %337 = vadd.xlane.f32.xlu0 %v336
    %v338 = vpop.xlane.xlu0 %337
    %v339 = vsel %vm54, %v299, 0.0
    %340 = vadd.xlane.f32.xlu0 %v339
    %v341 = vpop.xlane.xlu0 %340
    %v342 = vsel %vm54, %v300, 0.0
    %343 = vadd.xlane.f32.xlu0 %v342
    %v344 = vpop.xlane.xlu0 %343
    %v345 = vsel %vm54, %v301, 0.0
    %346 = vadd.xlane.f32.xlu0 %v345
    %v347 = vpop.xlane.xlu0 %346
    %v348 = vsel %vm54, %v302, 0.0
    %349 = vadd.xlane.f32.xlu0 %v348
    %v350 = vpop.xlane.xlu0 %349
    %v351 = vmul.f32 %v305, %v103
    %v352 = vmul.f32 %v308, %v103
    %v353 = vmul.f32 %v311, %v103
    %v354 = vmul.f32 %v314, %v103
    %v355 = vmul.f32 %v317, %v103
    %v356 = vmul.f32 %v320, %v103
    %v357 = vmul.f32 %v323, %v103
    %v358 = vmul.f32 %v326, %v103
    %v359 = vmul.f32 %v329, %v103
    %v360 = vmul.f32 %v332, %v103
    %v361 = vmul.f32 %v335, %v103
    %v362 = vmul.f32 %v338, %v103
    %v363 = vmul.f32 %v341, %v103
    %v364 = vmul.f32 %v344, %v103
    %v365 = vmul.f32 %v347, %v103
    %v366 = vmul.f32 %v350, %v103
    %v367 = vsub.f32 %v287, %v351
    %v368 = vsub.f32 %v288, %v352
    %v369 = vsub.f32 %v289, %v353
    %v370 = vsub.f32 %v290, %v354
    %v371 = vsub.f32 %v291, %v355
    %v372 = vsub.f32 %v292, %v356
    %v373 = vsub.f32 %v293, %v357
    %v374 = vsub.f32 %v294, %v358
    %v375 = vsub.f32 %v295, %v359
    %v376 = vsub.f32 %v296, %v360
    %v377 = vsub.f32 %v297, %v361
    %v378 = vsub.f32 %v298, %v362
    %v379 = vsub.f32 %v299, %v363
    %v380 = vsub.f32 %v300, %v364
    %v381 = vsub.f32 %v301, %v365
    %v382 = vsub.f32 %v302, %v366
    %v383 = vmul.f32 %v367, %v367
    %v384 = vmul.f32 %v368, %v368
    %v385 = vmul.f32 %v369, %v369
    %v386 = vmul.f32 %v370, %v370
    %v387 = vmul.f32 %v371, %v371
    %v388 = vmul.f32 %v372, %v372
    %v389 = vmul.f32 %v373, %v373
    %v390 = vmul.f32 %v374, %v374
    %v391 = vmul.f32 %v375, %v375
    %v392 = vmul.f32 %v376, %v376
    %v393 = vmul.f32 %v377, %v377
    %v394 = vmul.f32 %v378, %v378
    %v395 = vmul.f32 %v379, %v379
    %v396 = vmul.f32 %v380, %v380
    %v397 = vmul.f32 %v381, %v381
    %v398 = vmul.f32 %v382, %v382
    %v399 = vsel %vm54, %v383, 0.0
    %400 = vadd.xlane.f32.xlu0 %v399
    %v401 = vpop.xlane.xlu0 %400
    %v402 = vsel %vm54, %v384, 0.0
    %403 = vadd.xlane.f32.xlu0 %v402
    %v404 = vpop.xlane.xlu0 %403
    %v405 = vsel %vm54, %v385, 0.0
    %406 = vadd.xlane.f32.xlu0 %v405
    %v407 = vpop.xlane.xlu0 %406
    %v408 = vsel %vm54, %v386, 0.0
    %409 = vadd.xlane.f32.xlu0 %v408
    %v410 = vpop.xlane.xlu0 %409
    %v411 = vsel %vm54, %v387, 0.0
    %412 = vadd.xlane.f32.xlu0 %v411
    %v413 = vpop.xlane.xlu0 %412
    %v414 = vsel %vm54, %v388, 0.0
    %415 = vadd.xlane.f32.xlu0 %v414
    %v416 = vpop.xlane.xlu0 %415
    %v417 = vsel %vm54, %v389, 0.0
    %418 = vadd.xlane.f32.xlu0 %v417
    %v419 = vpop.xlane.xlu0 %418
    %v420 = vsel %vm54, %v390, 0.0
    %421 = vadd.xlane.f32.xlu0 %v420
    %v422 = vpop.xlane.xlu0 %421
    %v423 = vsel %vm54, %v391, 0.0
    %424 = vadd.xlane.f32.xlu0 %v423
    %v425 = vpop.xlane.xlu0 %424
    %v426 = vsel %vm54, %v392, 0.0
    %427 = vadd.xlane.f32.xlu0 %v426
    %v428 = vpop.xlane.xlu0 %427
    %v429 = vsel %vm54, %v393, 0.0
    %430 = vadd.xlane.f32.xlu0 %v429
    %v431 = vpop.xlane.xlu0 %430
    %v432 = vsel %vm54, %v394, 0.0
    %433 = vadd.xlane.f32.xlu0 %v432
    %v434 = vpop.xlane.xlu0 %433
    %v435 = vsel %vm54, %v395, 0.0
    %436 = vadd.xlane.f32.xlu0 %v435
    %v437 = vpop.xlane.xlu0 %436
    %v438 = vsel %vm54, %v396, 0.0
    %439 = vadd.xlane.f32.xlu0 %v438
    %v440 = vpop.xlane.xlu0 %439
    %v441 = vsel %vm54, %v397, 0.0
    %442 = vadd.xlane.f32.xlu0 %v441
    %v443 = vpop.xlane.xlu0 %442
    %v444 = vsel %vm54, %v398, 0.0
    %445 = vadd.xlane.f32.xlu0 %v444
    %v446 = vpop.xlane.xlu0 %445
    %v447 = vmul.f32 %v401, %v103
    %v448 = vmul.f32 %v404, %v103
    %v449 = vmul.f32 %v407, %v103
    %v450 = vmul.f32 %v410, %v103
    %v451 = vmul.f32 %v413, %v103
    %v452 = vmul.f32 %v416, %v103
    %v453 = vmul.f32 %v419, %v103
    %v454 = vmul.f32 %v422, %v103
    %v455 = vmul.f32 %v425, %v103
    %v456 = vmul.f32 %v428, %v103
    %v457 = vmul.f32 %v431, %v103
    %v458 = vmul.f32 %v434, %v103
    %v459 = vmul.f32 %v437, %v103
    %v460 = vmul.f32 %v440, %v103
    %v461 = vmul.f32 %v443, %v103
    %v462 = vmul.f32 %v446, %v103
    %v463 = vadd.f32 %v447, 1e-06
    %v464 = vadd.f32 %v448, 1e-06
    %v465 = vadd.f32 %v449, 1e-06
    %v466 = vadd.f32 %v450, 1e-06
    %v467 = vadd.f32 %v451, 1e-06
    %v468 = vadd.f32 %v452, 1e-06
    %v469 = vadd.f32 %v453, 1e-06
    %v470 = vadd.f32 %v454, 1e-06
    %v471 = vadd.f32 %v455, 1e-06
    %v472 = vadd.f32 %v456, 1e-06
    %v473 = vadd.f32 %v457, 1e-06
    %v474 = vadd.f32 %v458, 1e-06
    %v475 = vadd.f32 %v459, 1e-06
    %v476 = vadd.f32 %v460, 1e-06
    %v477 = vadd.f32 %v461, 1e-06
    %v478 = vadd.f32 %v462, 1e-06
    %v479 = vrsqrt.pop %v463
    %v480 = vrsqrt.pop %v464
    %v481 = vrsqrt.pop %v465
    %v482 = vrsqrt.pop %v466
    %v483 = vrsqrt.pop %v467
    %v484 = vrsqrt.pop %v468
    %v485 = vrsqrt.pop %v469
    %v486 = vrsqrt.pop %v470
    %v487 = vrsqrt.pop %v471
    %v488 = vrsqrt.pop %v472
    %v489 = vrsqrt.pop %v473
    %v490 = vrsqrt.pop %v474
    %v491 = vrsqrt.pop %v475
    %v492 = vrsqrt.pop %v476
    %v493 = vrsqrt.pop %v477
    %v494 = vrsqrt.pop %v478
    %v495 = vmul.f32 %v367, %v479
    %v496 = vmul.f32 %v368, %v480
    %v497 = vmul.f32 %v369, %v481
    %v498 = vmul.f32 %v370, %v482
    %v499 = vmul.f32 %v371, %v483
    %v500 = vmul.f32 %v372, %v484
    %v501 = vmul.f32 %v373, %v485
    %v502 = vmul.f32 %v374, %v486
    %v503 = vmul.f32 %v375, %v487
    %v504 = vmul.f32 %v376, %v488
    %v505 = vmul.f32 %v377, %v489
    %v506 = vmul.f32 %v378, %v490
    %v507 = vmul.f32 %v379, %v491
    %v508 = vmul.f32 %v380, %v492
    %v509 = vmul.f32 %v381, %v493
    %v510 = vmul.f32 %v382, %v494
    %v511 = vld [vmem:[%s3] sm:$0x1]
    %v513 = vlaneseq
    %v514 = vshrl.u32 %v513, 7
    %v515 = vsub.s32 0, %v514
    %v516 = vrot.slane %v511, %v515
    %v518 = vmul.f32 %v495, %v516
    %v519 = vmul.f32 %v496, %v516
    %v520 = vmul.f32 %v497, %v516
    %v521 = vmul.f32 %v498, %v516
    %v522 = vmul.f32 %v499, %v516
    %v523 = vmul.f32 %v500, %v516
    %v524 = vmul.f32 %v501, %v516
    %v525 = vmul.f32 %v502, %v516
    %v526 = vmul.f32 %v503, %v516
    %v527 = vmul.f32 %v504, %v516
    %v528 = vmul.f32 %v505, %v516
    %v529 = vmul.f32 %v506, %v516
    %v530 = vmul.f32 %v507, %v516
    %v531 = vmul.f32 %v508, %v516
    %v532 = vmul.f32 %v509, %v516
    %v533 = vmul.f32 %v510, %v516
    %v534 = vpack.c.bf16 %v519, %v518
    %v535 = vpack.c.bf16 %v521, %v520
    %v536 = vpack.c.bf16 %v523, %v522
    %v537 = vpack.c.bf16 %v525, %v524
    %v538 = vpack.c.bf16 %v527, %v526
    %v539 = vpack.c.bf16 %v529, %v528
    %v540 = vpack.c.bf16 %v531, %v530
    %v541 = vpack.c.bf16 %v533, %v532
    %v542 = vld [vmem:[%s4] sm:$0xff]
    %v543 = vld [vmem:[%s4 + $0x8] sm:$0xff]
    %v544 = vld [vmem:[%s4 + $0x10] sm:$0xff]
    %v545 = vld [vmem:[%s4 + $0x18] sm:$0xff]
    %v546 = vld [vmem:[%s4 + $0x20] sm:$0xff]
    %v547 = vld [vmem:[%s4 + $0x28] sm:$0xff]
    %v548 = vld [vmem:[%s4 + $0x30] sm:$0xff]
    %v549 = vld [vmem:[%s4 + $0x38] sm:$0xff]
    %v558 = vunpack.c.l.b16 %v542
    %v559 = vunpack.c.h.b16 %v542
    %v560 = vunpack.c.l.b16 %v543
    %v561 = vunpack.c.h.b16 %v543
    %v562 = vunpack.c.l.b16 %v544
    %v563 = vunpack.c.h.b16 %v544
    %v564 = vunpack.c.l.b16 %v545
    %v565 = vunpack.c.h.b16 %v545
    %v566 = vunpack.c.l.b16 %v546
    %v567 = vunpack.c.h.b16 %v546
    %v568 = vunpack.c.l.b16 %v547
    %v569 = vunpack.c.h.b16 %v547
    %v570 = vunpack.c.l.b16 %v548
    %v571 = vunpack.c.h.b16 %v548
    %v572 = vunpack.c.l.b16 %v549
    %v573 = vunpack.c.h.b16 %v549
    %v574 = vpack.c.b16 %v560, %v558
    %v575 = vpack.c.b16 %v561, %v559
    %v576 = vpack.c.b16 %v564, %v562
    %v577 = vpack.c.b16 %v565, %v563
    %v578 = vpack.c.b16 %v568, %v566
    %v579 = vpack.c.b16 %v569, %v567
    %v580 = vpack.c.b16 %v572, %v570
    %v581 = vpack.c.b16 %v573, %v571
    %v591 = vsel %vm54, %v534, 0
    %v594 = vsel %vm54, %v535, 0
    %v597 = vsel %vm54, %v536, 0
    %v600 = vsel %vm54, %v537, 0
    %v603 = vsel %vm54, %v538, 0
    %v606 = vsel %vm54, %v539, 0
    %v609 = vsel %vm54, %v540, 0
    %v612 = vsel %vm54, %v541, 0
    %614 = vmatprep.subr.bf16.mxu0 0
    %615 = vmatpush1.bf16.msra.mxu0 0
    %616 = vmatprep.subr.bf16.mxu0 0
    %617 = vmatpush1.bf16.msra.mxu0 0
    %618 = vmatprep.subr.bf16.mxu0 0
    %619 = vmatpush1.bf16.msra.mxu0 0
    %620 = vmatprep.subr.bf16.mxu0 0
    %621 = vmatpush1.bf16.msra.mxu0 0
    %622 = vmatprep.subr.bf16.mxu0 %v581
    %623 = vmatpush1.bf16.msra.mxu0 %v580
    %624 = vmatprep.subr.bf16.mxu0 %v579
    %625 = vmatpush1.bf16.msra.mxu0 %v578
    %626 = vmatprep.subr.bf16.mxu0 %v577
    %627 = vmatpush1.bf16.msra.mxu0 %v576
    %628 = vmatprep.subr.bf16.mxu0 %v575
    %629 = vmatpush1.bf16.msra.mxu0 %v574
    %630 = vmatprep.subr.bf16.mxu0 0
    %631 = vmatpush2.bf16.msra.mxu0 0
    %632 = vmatprep.subr.bf16.mxu0 0
    %633 = vmatpush2.bf16.msra.mxu0 0
    %634 = vmatprep.subr.bf16.mxu0 0
    %635 = vmatpush2.bf16.msra.mxu0 0
    %636 = vmatprep.subr.bf16.mxu0 0
    %637 = vmatpush2.bf16.msra.mxu0 0
    %638 = vmatprep.subr.bf16.mxu0 0
    %639 = vmatpush2.bf16.msra.mxu0 0
    %640 = vmatprep.subr.bf16.mxu0 0
    %641 = vmatpush2.bf16.msra.mxu0 0
    %642 = vmatprep.subr.bf16.mxu0 0
    %643 = vmatpush2.bf16.msra.mxu0 0
    %644 = vmatprep.subr.bf16.mxu0 0
    %645 = vmatpush2.bf16.msra.mxu0 0
    %646 = vmatprep.mubr.bf16.mxu0 0
    %647 = vmatmul.mubr.bf16.gmra.mxu0 %v591
    %v648 = vpop.f32.mrf.mxu0
    %v649 = vadd.f32 0.0, %v648
    %v650 = vpop.f32.mrf.mxu0
    %v651 = vadd.f32 0.0, %v650
    %v652 = vpop.f32.mrf.mxu0
    %v653 = vadd.f32 0.0, %v652
    %v654 = vpop.f32.mrf.mxu0
    %v655 = vadd.f32 0.0, %v654
    %656 = vmatprep.mubr.bf16.mxu0 0
    %657 = vmatmul.mubr.bf16.gmra.mxu0 %v594
    %v658 = vpop.f32.mrf.mxu0
    %v659 = vadd.f32 0.0, %v658
    %v660 = vpop.f32.mrf.mxu0
    %v661 = vadd.f32 0.0, %v660
    %v662 = vpop.f32.mrf.mxu0
    %v663 = vadd.f32 0.0, %v662
    %v664 = vpop.f32.mrf.mxu0
    %v665 = vadd.f32 0.0, %v664
    %666 = vmatprep.mubr.bf16.mxu0 0
    %667 = vmatmul.mubr.bf16.gmra.mxu0 %v597
    %v668 = vpop.f32.mrf.mxu0
    %v669 = vadd.f32 0.0, %v668
    %v670 = vpop.f32.mrf.mxu0
    %v671 = vadd.f32 0.0, %v670
    %v672 = vpop.f32.mrf.mxu0
    %v673 = vadd.f32 0.0, %v672
    %v674 = vpop.f32.mrf.mxu0
    %v675 = vadd.f32 0.0, %v674
    %676 = vmatprep.mubr.bf16.mxu0 0
    %677 = vmatmul.mubr.bf16.gmra.mxu0 %v600
    %v678 = vpop.f32.mrf.mxu0
    %v679 = vadd.f32 0.0, %v678
    %v680 = vpop.f32.mrf.mxu0
    %v681 = vadd.f32 0.0, %v680
    %v682 = vpop.f32.mrf.mxu0
    %v683 = vadd.f32 0.0, %v682
    %v684 = vpop.f32.mrf.mxu0
    %v685 = vadd.f32 0.0, %v684
    %686 = vmatprep.mubr.bf16.mxu0 0
    %687 = vmatmul.mubr.bf16.gmra.mxu0 %v603
    %v688 = vpop.f32.mrf.mxu0
    %v689 = vadd.f32 0.0, %v688
    %v690 = vpop.f32.mrf.mxu0
    %v691 = vadd.f32 0.0, %v690
    %v692 = vpop.f32.mrf.mxu0
    %v693 = vadd.f32 0.0, %v692
    %v694 = vpop.f32.mrf.mxu0
    %v695 = vadd.f32 0.0, %v694
    %696 = vmatprep.mubr.bf16.mxu0 0
    %697 = vmatmul.mubr.bf16.gmra.mxu0 %v606
    %v698 = vpop.f32.mrf.mxu0
    %v699 = vadd.f32 0.0, %v698
    %v700 = vpop.f32.mrf.mxu0
    %v701 = vadd.f32 0.0, %v700
    %v702 = vpop.f32.mrf.mxu0
    %v703 = vadd.f32 0.0, %v702
    %v704 = vpop.f32.mrf.mxu0
    %v705 = vadd.f32 0.0, %v704
    %706 = vmatprep.mubr.bf16.mxu0 0
    %707 = vmatmul.mubr.bf16.gmra.mxu0 %v609
    %v708 = vpop.f32.mrf.mxu0
    %v709 = vadd.f32 0.0, %v708
    %v710 = vpop.f32.mrf.mxu0
    %v711 = vadd.f32 0.0, %v710
    %v712 = vpop.f32.mrf.mxu0
    %v713 = vadd.f32 0.0, %v712
    %v714 = vpop.f32.mrf.mxu0
    %v715 = vadd.f32 0.0, %v714
    %716 = vmatprep.mubr.bf16.mxu0 0
    %717 = vmatmul.mubr.bf16.gmra.mxu0 %v612
    %v718 = vpop.f32.mrf.mxu0
    %v719 = vadd.f32 0.0, %v718
    %v720 = vpop.f32.mrf.mxu0
    %v721 = vadd.f32 0.0, %v720
    %v722 = vpop.f32.mrf.mxu0
    %v723 = vadd.f32 0.0, %v722
    %v724 = vpop.f32.mrf.mxu0
    %v725 = vadd.f32 0.0, %v724
    %726 = vdwg.mxu0
    %v727 = vmax.f32 %v649, 0.0
    %v728 = vmax.f32 %v651, 0.0
    %v729 = vmax.f32 %v653, 0.0
    %v730 = vmax.f32 %v655, 0.0
    %v731 = vmax.f32 %v659, 0.0
    %v732 = vmax.f32 %v661, 0.0
    %v733 = vmax.f32 %v663, 0.0
    %v734 = vmax.f32 %v665, 0.0
    %v735 = vmax.f32 %v669, 0.0
    %v736 = vmax.f32 %v671, 0.0
    %v737 = vmax.f32 %v673, 0.0
    %v738 = vmax.f32 %v675, 0.0
    %v739 = vmax.f32 %v679, 0.0
    %v740 = vmax.f32 %v681, 0.0
    %v741 = vmax.f32 %v683, 0.0
    %v742 = vmax.f32 %v685, 0.0
    %v743 = vmax.f32 %v689, 0.0
    %v744 = vmax.f32 %v691, 0.0
    %v745 = vmax.f32 %v693, 0.0
    %v746 = vmax.f32 %v695, 0.0
    %v747 = vmax.f32 %v699, 0.0
    %v748 = vmax.f32 %v701, 0.0
    %v749 = vmax.f32 %v703, 0.0
    %v750 = vmax.f32 %v705, 0.0
    %v751 = vmax.f32 %v709, 0.0
    %v752 = vmax.f32 %v711, 0.0
    %v753 = vmax.f32 %v713, 0.0
    %v754 = vmax.f32 %v715, 0.0
    %v755 = vmax.f32 %v719, 0.0
    %v756 = vmax.f32 %v721, 0.0
    %v757 = vmax.f32 %v723, 0.0
    %v758 = vmax.f32 %v725, 0.0
    %s759 = sld [smem:[#allocation2]]
    %v760 = vmul.f32 %v727, %v727
    %v761 = vmul.f32 %v728, %v728
    %v762 = vmul.f32 %v729, %v729
    %v763 = vmul.f32 %v730, %v730
    %v764 = vmul.f32 %v731, %v731
    %v765 = vmul.f32 %v732, %v732
    %v766 = vmul.f32 %v733, %v733
    %v767 = vmul.f32 %v734, %v734
    %v768 = vmul.f32 %v735, %v735
    %v769 = vmul.f32 %v736, %v736
    %v770 = vmul.f32 %v737, %v737
    %v771 = vmul.f32 %v738, %v738
    %v772 = vmul.f32 %v739, %v739
    %v773 = vmul.f32 %v740, %v740
    %v774 = vmul.f32 %v741, %v741
    %v775 = vmul.f32 %v742, %v742
    %v776 = vmul.f32 %v743, %v743
    %v777 = vmul.f32 %v744, %v744
    %v778 = vmul.f32 %v745, %v745
    %v779 = vmul.f32 %v746, %v746
    %v780 = vmul.f32 %v747, %v747
    %v781 = vmul.f32 %v748, %v748
    %v782 = vmul.f32 %v749, %v749
    %v783 = vmul.f32 %v750, %v750
    %v784 = vmul.f32 %v751, %v751
    %v785 = vmul.f32 %v752, %v752
    %v786 = vmul.f32 %v753, %v753
    %v787 = vmul.f32 %v754, %v754
    %v788 = vmul.f32 %v755, %v755
    %v789 = vmul.f32 %v756, %v756
    %v790 = vmul.f32 %v757, %v757
    %v791 = vmul.f32 %v758, %v758
    %v792 = vstv %s759
    %v793 = vmul.f32 %v792, %v760
    %v794 = vmul.f32 %v792, %v761
    %v795 = vmul.f32 %v792, %v762
    %v796 = vmul.f32 %v792, %v763
    %v797 = vmul.f32 %v792, %v764
    %v798 = vmul.f32 %v792, %v765
    %v799 = vmul.f32 %v792, %v766
    %v800 = vmul.f32 %v792, %v767
    %v801 = vmul.f32 %v792, %v768
    %v802 = vmul.f32 %v792, %v769
    %v803 = vmul.f32 %v792, %v770
    %v804 = vmul.f32 %v792, %v771
    %v805 = vmul.f32 %v792, %v772
    %v806 = vmul.f32 %v792, %v773
    %v807 = vmul.f32 %v792, %v774
    %v808 = vmul.f32 %v792, %v775
    %v809 = vmul.f32 %v792, %v776
    %v810 = vmul.f32 %v792, %v777
    %v811 = vmul.f32 %v792, %v778
    %v812 = vmul.f32 %v792, %v779
    %v813 = vmul.f32 %v792, %v780
    %v814 = vmul.f32 %v792, %v781
    %v815 = vmul.f32 %v792, %v782
    %v816 = vmul.f32 %v792, %v783
    %v817 = vmul.f32 %v792, %v784
    %v818 = vmul.f32 %v792, %v785
    %v819 = vmul.f32 %v792, %v786
    %v820 = vmul.f32 %v792, %v787
    %v821 = vmul.f32 %v792, %v788
    %v822 = vmul.f32 %v792, %v789
    %v823 = vmul.f32 %v792, %v790
    %v824 = vmul.f32 %v792, %v791
    %s825 = sld [smem:[#allocation2 + $0x1]]
    %v826 = vstv %s825
    %v827 = vadd.f32 %v793, %v826
    %v828 = vadd.f32 %v794, %v826
    %v829 = vadd.f32 %v795, %v826
    %v830 = vadd.f32 %v796, %v826
    %v831 = vadd.f32 %v797, %v826
    %v832 = vadd.f32 %v798, %v826
    %v833 = vadd.f32 %v799, %v826
    %v834 = vadd.f32 %v800, %v826
    %v835 = vadd.f32 %v801, %v826
    %v836 = vadd.f32 %v802, %v826
    %v837 = vadd.f32 %v803, %v826
    %v838 = vadd.f32 %v804, %v826
    %v839 = vadd.f32 %v805, %v826
    %v840 = vadd.f32 %v806, %v826
    %v841 = vadd.f32 %v807, %v826
    %v842 = vadd.f32 %v808, %v826
    %v843 = vadd.f32 %v809, %v826
    %v844 = vadd.f32 %v810, %v826
    %v845 = vadd.f32 %v811, %v826
    %v846 = vadd.f32 %v812, %v826
    %v847 = vadd.f32 %v813, %v826
    %v848 = vadd.f32 %v814, %v826
    %v849 = vadd.f32 %v815, %v826
    %v850 = vadd.f32 %v816, %v826
    %v851 = vadd.f32 %v817, %v826
    %v852 = vadd.f32 %v818, %v826
    %v853 = vadd.f32 %v819, %v826
    %v854 = vadd.f32 %v820, %v826
    %v855 = vadd.f32 %v821, %v826
    %v856 = vadd.f32 %v822, %v826
    %v857 = vadd.f32 %v823, %v826
    %v858 = vadd.f32 %v824, %v826
    %v859 = vpack.c.bf16 %v829, %v827
    %v860 = vpack.c.bf16 %v830, %v828
    %v861 = vpack.c.bf16 %v833, %v831
    %v862 = vpack.c.bf16 %v834, %v832
    %v863 = vpack.c.bf16 %v837, %v835
    %v864 = vpack.c.bf16 %v838, %v836
    %v865 = vpack.c.bf16 %v841, %v839
    %v866 = vpack.c.bf16 %v842, %v840
    %v867 = vpack.c.bf16 %v845, %v843
    %v868 = vpack.c.bf16 %v846, %v844
    %v869 = vpack.c.bf16 %v849, %v847
    %v870 = vpack.c.bf16 %v850, %v848
    %v871 = vpack.c.bf16 %v853, %v851
    %v872 = vpack.c.bf16 %v854, %v852
    %v873 = vpack.c.bf16 %v857, %v855
    %v874 = vpack.c.bf16 %v858, %v856
    %v875 = vld [vmem:[%s5] sm:$0xf]
    %v876 = vld [vmem:[%s5 + $0x4] sm:$0xf]
    %v877 = vld [vmem:[%s5 + $0x8] sm:$0xf]
    %v878 = vld [vmem:[%s5 + $0xc] sm:$0xf]
    %v879 = vld [vmem:[%s5 + $0x10] sm:$0xf]
    %v880 = vld [vmem:[%s5 + $0x14] sm:$0xf]
    %v881 = vld [vmem:[%s5 + $0x18] sm:$0xf]
    %v882 = vld [vmem:[%s5 + $0x1c] sm:$0xf]
    %v883 = vld [vmem:[%s5 + $0x20] sm:$0xf]
    %v884 = vld [vmem:[%s5 + $0x24] sm:$0xf]
    %v885 = vld [vmem:[%s5 + $0x28] sm:$0xf]
    %v886 = vld [vmem:[%s5 + $0x2c] sm:$0xf]
    %v887 = vld [vmem:[%s5 + $0x30] sm:$0xf]
    %v888 = vld [vmem:[%s5 + $0x34] sm:$0xf]
    %v889 = vld [vmem:[%s5 + $0x38] sm:$0xf]
    %v890 = vld [vmem:[%s5 + $0x3c] sm:$0xf]
    %v891 = vld [vmem:[%s5 + $0x40] sm:$0xf]
    %v892 = vld [vmem:[%s5 + $0x44] sm:$0xf]
    %v893 = vld [vmem:[%s5 + $0x48] sm:$0xf]
    %v894 = vld [vmem:[%s5 + $0x4c] sm:$0xf]
    %v895 = vld [vmem:[%s5 + $0x50] sm:$0xf]
    %v896 = vld [vmem:[%s5 + $0x54] sm:$0xf]
    %v897 = vld [vmem:[%s5 + $0x58] sm:$0xf]
    %v898 = vld [vmem:[%s5 + $0x5c] sm:$0xf]
    %v899 = vld [vmem:[%s5 + $0x60] sm:$0xf]
    %v900 = vld [vmem:[%s5 + $0x64] sm:$0xf]
    %v901 = vld [vmem:[%s5 + $0x68] sm:$0xf]
    %v902 = vld [vmem:[%s5 + $0x6c] sm:$0xf]
    %v903 = vld [vmem:[%s5 + $0x70] sm:$0xf]
    %v904 = vld [vmem:[%s5 + $0x74] sm:$0xf]
    %v905 = vld [vmem:[%s5 + $0x78] sm:$0xf]
    %v906 = vld [vmem:[%s5 + $0x7c] sm:$0xf]
    %v939 = vunpack.c.l.b16 %v875
    %v940 = vunpack.c.l.b16 %v876
    %v941 = vunpack.c.l.b16 %v877
    %v942 = vunpack.c.l.b16 %v878
    %v943 = vunpack.c.l.b16 %v879
    %v944 = vunpack.c.l.b16 %v880
    %v945 = vunpack.c.l.b16 %v881
    %v946 = vunpack.c.l.b16 %v882
    %v947 = vunpack.c.l.b16 %v883
    %v948 = vunpack.c.l.b16 %v884
    %v949 = vunpack.c.l.b16 %v885
    %v950 = vunpack.c.l.b16 %v886
    %v951 = vunpack.c.l.b16 %v887
    %v952 = vunpack.c.l.b16 %v888
    %v953 = vunpack.c.l.b16 %v889
    %v954 = vunpack.c.l.b16 %v890
    %v955 = vunpack.c.l.b16 %v891
    %v956 = vunpack.c.l.b16 %v892
    %v957 = vunpack.c.l.b16 %v893
    %v958 = vunpack.c.l.b16 %v894
    %v959 = vunpack.c.l.b16 %v895
    %v960 = vunpack.c.l.b16 %v896
    %v961 = vunpack.c.l.b16 %v897
    %v962 = vunpack.c.l.b16 %v898
    %v963 = vunpack.c.l.b16 %v899
    %v964 = vunpack.c.l.b16 %v900
    %v965 = vunpack.c.l.b16 %v901
    %v966 = vunpack.c.l.b16 %v902
    %v967 = vunpack.c.l.b16 %v903
    %v968 = vunpack.c.l.b16 %v904
    %v969 = vunpack.c.l.b16 %v905
    %v970 = vunpack.c.l.b16 %v906
    %v971 = vpack.c.b16 %v940, %v939
    %v972 = vpack.c.b16 %v942, %v941
    %v973 = vpack.c.b16 %v944, %v943
    %v974 = vpack.c.b16 %v946, %v945
    %v975 = vpack.c.b16 %v948, %v947
    %v976 = vpack.c.b16 %v950, %v949
    %v977 = vpack.c.b16 %v952, %v951
    %v978 = vpack.c.b16 %v954, %v953
    %v979 = vpack.c.b16 %v956, %v955
    %v980 = vpack.c.b16 %v958, %v957
    %v981 = vpack.c.b16 %v960, %v959
    %v982 = vpack.c.b16 %v962, %v961
    %v983 = vpack.c.b16 %v964, %v963
    %v984 = vpack.c.b16 %v966, %v965
    %v985 = vpack.c.b16 %v968, %v967
    %v986 = vpack.c.b16 %v970, %v969
    %1003 = vmatprep.subr.bf16.mxu0 0
    %1004 = vmatpush1.bf16.msra.mxu0 %v978
    %1005 = vmatprep.subr.bf16.mxu0 0
    %1006 = vmatpush1.bf16.msra.mxu0 %v977
    %1007 = vmatprep.subr.bf16.mxu0 0
    %1008 = vmatpush1.bf16.msra.mxu0 %v976
    %1009 = vmatprep.subr.bf16.mxu0 0
    %1010 = vmatpush1.bf16.msra.mxu0 %v975
    %1011 = vmatprep.subr.bf16.mxu0 0
    %1012 = vmatpush1.bf16.msra.mxu0 %v974
    %1013 = vmatprep.subr.bf16.mxu0 0
    %1014 = vmatpush1.bf16.msra.mxu0 %v973
    %1015 = vmatprep.subr.bf16.mxu0 0
    %1016 = vmatpush1.bf16.msra.mxu0 %v972
    %1017 = vmatprep.subr.bf16.mxu0 0
    %1018 = vmatpush1.bf16.msra.mxu0 %v971
    %1019 = vmatprep.subr.bf16.mxu0 0
    %1020 = vmatpush2.bf16.msra.mxu0 %v986
    %1021 = vmatprep.subr.bf16.mxu0 0
    %1022 = vmatpush2.bf16.msra.mxu0 %v985
    %1023 = vmatprep.subr.bf16.mxu0 0
    %1024 = vmatpush2.bf16.msra.mxu0 %v984
    %1025 = vmatprep.subr.bf16.mxu0 0
    %1026 = vmatpush2.bf16.msra.mxu0 %v983
    %1027 = vmatprep.subr.bf16.mxu0 0
    %1028 = vmatpush2.bf16.msra.mxu0 %v982
    %1029 = vmatprep.subr.bf16.mxu0 0
    %1030 = vmatpush2.bf16.msra.mxu0 %v981
    %1031 = vmatprep.subr.bf16.mxu0 0
    %1032 = vmatpush2.bf16.msra.mxu0 %v980
    %1033 = vmatprep.subr.bf16.mxu0 0
    %1034 = vmatpush2.bf16.msra.mxu0 %v979
    %1035 = vmatprep.mubr.bf16.mxu0 %v860
    %1036 = vmatmul.mubr.bf16.gmra.mxu0 %v859
    %v1037 = vpop.f32.mrf.mxu0
    %v1038 = vadd.f32 0.0, %v1037
    %v1039 = vpop.f32.mrf.mxu0
    %v1040 = vpop.f32.mrf.mxu0
    %v1041 = vadd.f32 0.0, %v1040
    %v1042 = vpop.f32.mrf.mxu0
    %1043 = vmatprep.mubr.bf16.mxu0 %v862
    %1044 = vmatmul.mubr.bf16.gmra.mxu0 %v861
    %v1045 = vpop.f32.mrf.mxu0
    %v1046 = vadd.f32 0.0, %v1045
    %v1047 = vpop.f32.mrf.mxu0
    %v1048 = vpop.f32.mrf.mxu0
    %v1049 = vadd.f32 0.0, %v1048
    %v1050 = vpop.f32.mrf.mxu0
    %1051 = vmatprep.mubr.bf16.mxu0 %v864
    %1052 = vmatmul.mubr.bf16.gmra.mxu0 %v863
    %v1053 = vpop.f32.mrf.mxu0
    %v1054 = vadd.f32 0.0, %v1053
    %v1055 = vpop.f32.mrf.mxu0
    %v1056 = vpop.f32.mrf.mxu0
    %v1057 = vadd.f32 0.0, %v1056
    %v1058 = vpop.f32.mrf.mxu0
    %1059 = vmatprep.mubr.bf16.mxu0 %v866
    %1060 = vmatmul.mubr.bf16.gmra.mxu0 %v865
    %v1061 = vpop.f32.mrf.mxu0
    %v1062 = vadd.f32 0.0, %v1061
    %v1063 = vpop.f32.mrf.mxu0
    %v1064 = vpop.f32.mrf.mxu0
    %v1065 = vadd.f32 0.0, %v1064
    %v1066 = vpop.f32.mrf.mxu0
    %1067 = vmatprep.mubr.bf16.mxu0 %v868
    %1068 = vmatmul.mubr.bf16.gmra.mxu0 %v867
    %v1069 = vpop.f32.mrf.mxu0
    %v1070 = vadd.f32 0.0, %v1069
    %v1071 = vpop.f32.mrf.mxu0
    %v1072 = vpop.f32.mrf.mxu0
    %v1073 = vadd.f32 0.0, %v1072
    %v1074 = vpop.f32.mrf.mxu0
    %1075 = vmatprep.mubr.bf16.mxu0 %v870
    %1076 = vmatmul.mubr.bf16.gmra.mxu0 %v869
    %v1077 = vpop.f32.mrf.mxu0
    %v1078 = vadd.f32 0.0, %v1077
    %v1079 = vpop.f32.mrf.mxu0
    %v1080 = vpop.f32.mrf.mxu0
    %v1081 = vadd.f32 0.0, %v1080
    %v1082 = vpop.f32.mrf.mxu0
    %1083 = vmatprep.mubr.bf16.mxu0 %v872
    %1084 = vmatmul.mubr.bf16.gmra.mxu0 %v871
    %v1085 = vpop.f32.mrf.mxu0
    %v1086 = vadd.f32 0.0, %v1085
    %v1087 = vpop.f32.mrf.mxu0
    %v1088 = vpop.f32.mrf.mxu0
    %v1089 = vadd.f32 0.0, %v1088
    %v1090 = vpop.f32.mrf.mxu0
    %1091 = vmatprep.mubr.bf16.mxu0 %v874
    %1092 = vmatmul.mubr.bf16.gmra.mxu0 %v873
    %v1093 = vpop.f32.mrf.mxu0
    %v1094 = vadd.f32 0.0, %v1093
    %v1095 = vpop.f32.mrf.mxu0
    %v1096 = vpop.f32.mrf.mxu0
    %v1097 = vadd.f32 0.0, %v1096
    %v1098 = vpop.f32.mrf.mxu0
    %1099 = vdwg.mxu0
    %v1100 = vadd.f32 %v287, %v1038
    %v1101 = vadd.f32 %v288, %v1041
    %v1102 = vadd.f32 %v289, %v1046
    %v1103 = vadd.f32 %v290, %v1049
    %v1104 = vadd.f32 %v291, %v1054
    %v1105 = vadd.f32 %v292, %v1057
    %v1106 = vadd.f32 %v293, %v1062
    %v1107 = vadd.f32 %v294, %v1065
    %v1108 = vadd.f32 %v295, %v1070
    %v1109 = vadd.f32 %v296, %v1073
    %v1110 = vadd.f32 %v297, %v1078
    %v1111 = vadd.f32 %v298, %v1081
    %v1112 = vadd.f32 %v299, %v1086
    %v1113 = vadd.f32 %v300, %v1089
    %v1114 = vadd.f32 %v301, %v1094
    %v1115 = vadd.f32 %v302, %v1097
    %1116 = vst.msk [vmem:[#allocation5] sm:$0xff] %vm54, %v1100
    %1117 = vst.msk [vmem:[#allocation5 + $0x8] sm:$0xff] %vm54, %v1101
    %1118 = vst.msk [vmem:[#allocation5 + $0x10] sm:$0xff] %vm54, %v1102
    %1119 = vst.msk [vmem:[#allocation5 + $0x18] sm:$0xff] %vm54, %v1103
    %1120 = vst.msk [vmem:[#allocation5 + $0x20] sm:$0xff] %vm54, %v1104
    %1121 = vst.msk [vmem:[#allocation5 + $0x28] sm:$0xff] %vm54, %v1105
    %1122 = vst.msk [vmem:[#allocation5 + $0x30] sm:$0xff] %vm54, %v1106
    %1123 = vst.msk [vmem:[#allocation5 + $0x38] sm:$0xff] %vm54, %v1107
    %1124 = vst.msk [vmem:[#allocation5 + $0x40] sm:$0xff] %vm54, %v1108
    %1125 = vst.msk [vmem:[#allocation5 + $0x48] sm:$0xff] %vm54, %v1109
    %1126 = vst.msk [vmem:[#allocation5 + $0x50] sm:$0xff] %vm54, %v1110
    %1127 = vst.msk [vmem:[#allocation5 + $0x58] sm:$0xff] %vm54, %v1111
    %1128 = vst.msk [vmem:[#allocation5 + $0x60] sm:$0xff] %vm54, %v1112
    %1129 = vst.msk [vmem:[#allocation5 + $0x68] sm:$0xff] %vm54, %v1113
    %1130 = vst.msk [vmem:[#allocation5 + $0x70] sm:$0xff] %vm54, %v1114
    %1131 = vst.msk [vmem:[#allocation5 + $0x78] sm:$0xff] %vm54, %v1115
    // Predicated region
    $region30: #{stage.3} parent=1 // pred_check
      _
    $region31: #{stage.3} parent=1 // pred_check_branch
      %1133 = sbr.rel (0) target = $region33
    $region32: #{stage.3} parent=1 // pred_region
      %s1135 = ssub.s32 2048, 2048
      %1136 = vsyncadd [#allocation3], %s1135
      %s1137 = sshll.u32 [#allocation5], 4
      %s1138 = int_to_ptr.vmem [resolvable:$true] %s1137
      %1143 = dma.vmem_to_hbm [thread:$0]  %s1138, 2048, %s6, [#allocation3], 128, 128, 8
    $region33: #{stage.3} parent=1 // pred_fallthru
      _
    // Predicated region
    $region34: #{stage.3} parent=1 // pred_check
      _
    $region35: #{stage.3} parent=1 // pred_check_branch
      %1145 = sbr.rel (0) target = $region37
    $region36: #{stage.3} parent=1 // pred_region
      %1146 = dma.done [#allocation3], 2048
    $region37: #{stage.3} parent=1 // pred_fallthru
      _
    %1147 = vsyncpa [#allocation3], 1
    %1148 = vsyncpa [#allocation4], 1

// kernel: stage.2
$region0: #{stage.2}
  #allocation0 [shape = 'u32[]', space=smem, size = 0x4, offset = 0x4, fixed_abs, tag = 'smem constant byte address 0x4 - core index']
  #allocation1 [shape = 'u32[144,128]{1,0:T(1,128)}', space=vmem, size = 0x12000, scoped, tag = 'internal scratch']
  %s0 = inlined_call_operand.vmem [shape: f32[2], index: 0, kind: input, shape index: {}]
  %s1 = inlined_call_operand.hbm [shape: f32[128,64], index: 1, kind: input, shape index: {}]
  %s2 = inlined_call_operand.vmem [shape: f32[1,64], index: 2, kind: input, shape index: {}]
  %s3 = inlined_call_operand.vmem [shape: f32[1,64], index: 3, kind: input, shape index: {}]
  %s4 = inlined_call_operand.hbm [shape: bf16[64,256], index: 4, kind: input, shape index: {}]
  %s5 = inlined_call_operand.hbm [shape: bf16[256,64], index: 5, kind: input, shape index: {}]
  %s6 = inlined_call_operand.vmem [shape: f32[128,64], index: 6, kind: output, shape index: {}]
  %s7 = sld [smem:[#allocation0]]
  $region50: #{stage.2} parent=0
    _
  %s9 = ssub.s32 1, %s7
  %s10 = scalar_select 0, %s9, %s7
  $region1: #{stage.2} parent=0
    #allocation2 [shape = 'u8[512]{0}', space=smem, size = 0x200, scoped, tag = 'input window, operand 0, single buffered']
    #allocation3 [shape = 's32[1]{0}', space=sflag, size = 0x4, scoped, tag = 'scoped memory for stage.2']
    #allocation4 [shape = 's32[1]{0}', space=sflag, size = 0x4, scoped, tag = 'scoped memory for stage.2']
    #allocation5 [shape = 'u8[65536]{0}', space=vmem, size = 0x10000, scoped, tag = 'input window, operand 1, single buffered']
    #allocation6 [shape = 'u8[32768]{0}', space=vmem, size = 0x8000, scoped, tag = 'input window, operand 4, single buffered']
    #allocation7 [shape = 's32[1]{0}', space=sflag, size = 0x4, scoped, tag = 'scoped memory for stage.2']
    #allocation8 [shape = 'u8[65536]{0}', space=vmem, size = 0x10000, scoped, tag = 'input window, operand 5, single buffered']
    %11 = vsyncpa [#allocation4], 0
    %12 = vsyncpa [#allocation3], 0
    %13 = vsyncpa [#allocation7], 0
    // Predicated region
    $region2: #{stage.2} parent=1 // pred_check
      _
    $region3: #{stage.2} parent=1 // pred_check_branch
      %15 = sbr.rel (0) target = $region5
    $region4: #{stage.2} parent=1 // pred_region
      %s17 = ssub.s32 16, 16
      %18 = vsyncadd [#allocation4], %s17
      %s20 = sshll.u32 %s0, 4
      %s21 = int_to_ptr.vmem [resolvable:$true] %s20
      %23 = dma.vmem_to_smem %s21, 16, [#allocation2], [#allocation4]
    $region5: #{stage.2} parent=1 // pred_fallthru
      _
    // Predicated region
    $region6: #{stage.2} parent=1 // pred_check
      _
    $region7: #{stage.2} parent=1 // pred_check_branch
      %25 = sbr.rel (0) target = $region9
    $region8: #{stage.2} parent=1 // pred_region
      %s27 = ssub.s32 2048, 2048
      %28 = vsyncadd [#allocation3], %s27
      %s29 = sshll.u32 [#allocation5], 4
      %s30 = int_to_ptr.vmem [resolvable:$true] %s29
      %35 = dma.hbm_to_vmem [thread:$0]  %s1, 2048, %s30, [#allocation3], 128, 128, 8
    $region9: #{stage.2} parent=1 // pred_fallthru
      _
    // Predicated region
    $region10: #{stage.2} parent=1 // pred_check
      _
    $region11: #{stage.2} parent=1 // pred_check_branch
      %37 = sbr.rel (0) target = $region13
    $region12: #{stage.2} parent=1 // pred_region
      _
    $region13: #{stage.2} parent=1 // pred_fallthru
      _
    // Predicated region
    $region14: #{stage.2} parent=1 // pred_check
      _
    $region15: #{stage.2} parent=1 // pred_check_branch
      %39 = sbr.rel (0) target = $region17
    $region16: #{stage.2} parent=1 // pred_region
      _
    $region17: #{stage.2} parent=1 // pred_fallthru
      _
    // Predicated region
    $region18: #{stage.2} parent=1 // pred_check
      _
    $region19: #{stage.2} parent=1 // pred_check_branch
      %41 = sbr.rel (0) target = $region21
    $region20: #{stage.2} parent=1 // pred_region
      %s43 = ssub.s32 1024, 1024
      %44 = vsyncadd [#allocation7], %s43
      %s45 = sshll.u32 [#allocation6], 4
      %s46 = int_to_ptr.vmem [resolvable:$true] %s45
      %51 = dma.hbm_to_vmem [thread:$0]  %s4, 1024, %s46, [#allocation7], 128, 128, 8
    $region21: #{stage.2} parent=1 // pred_fallthru
      _
    // Predicated region
    $region22: #{stage.2} parent=1 // pred_check
      _
    $region23: #{stage.2} parent=1 // pred_check_branch
      %53 = sbr.rel (0) target = $region25
    $region24: #{stage.2} parent=1 // pred_region
      %s55 = ssub.s32 2048, 2048
      %56 = vsyncadd [#allocation7], %s55
      %s57 = sshll.u32 [#allocation8], 4
      %s58 = int_to_ptr.vmem [resolvable:$true] %s57
      %63 = dma.hbm_to_vmem [thread:$0]  %s5, 2048, %s58, [#allocation7], 64, 64, 4
    $region25: #{stage.2} parent=1 // pred_fallthru
      _
    // Predicated region
    $region26: #{stage.2} parent=1 // pred_check
      _
    $region27: #{stage.2} parent=1 // pred_check_branch
      %65 = sbr.rel (0) target = $region29
    $region28: #{stage.2} parent=1 // pred_region
      %66 = dma.done [#allocation4], 16
    $region29: #{stage.2} parent=1 // pred_fallthru
      _
    // Predicated region
    $region30: #{stage.2} parent=1 // pred_check
      _
    $region31: #{stage.2} parent=1 // pred_check_branch
      %68 = sbr.rel (0) target = $region33
    $region32: #{stage.2} parent=1 // pred_region
      %69 = dma.done [#allocation3], 2048
    $region33: #{stage.2} parent=1 // pred_fallthru
      _
    // Predicated region
    $region34: #{stage.2} parent=1 // pred_check
      _
    $region35: #{stage.2} parent=1 // pred_check_branch
      %71 = sbr.rel (0) target = $region37
    $region36: #{stage.2} parent=1 // pred_region
      %72 = dma.done [#allocation7], 1024
    $region37: #{stage.2} parent=1 // pred_fallthru
      _
    // Predicated region
    $region38: #{stage.2} parent=1 // pred_check
      _
    $region39: #{stage.2} parent=1 // pred_check_branch
      %74 = sbr.rel (0) target = $region41
    $region40: #{stage.2} parent=1 // pred_region
      %75 = dma.done [#allocation7], 2048
    $region41: #{stage.2} parent=1 // pred_fallthru
      _
    %76 = sfence
    %v78 = vld [vmem:[#allocation5] sm:$0xff]
    %v79 = vld [vmem:[#allocation5 + $0x8] sm:$0xff]
    %v80 = vld [vmem:[#allocation5 + $0x10] sm:$0xff]
    %v81 = vld [vmem:[#allocation5 + $0x18] sm:$0xff]
    %v82 = vld [vmem:[#allocation5 + $0x20] sm:$0xff]
    %v83 = vld [vmem:[#allocation5 + $0x28] sm:$0xff]
    %v84 = vld [vmem:[#allocation5 + $0x30] sm:$0xff]
    %v85 = vld [vmem:[#allocation5 + $0x38] sm:$0xff]
    %v86 = vld [vmem:[#allocation5 + $0x40] sm:$0xff]
    %v87 = vld [vmem:[#allocation5 + $0x48] sm:$0xff]
    %v88 = vld [vmem:[#allocation5 + $0x50] sm:$0xff]
    %v89 = vld [vmem:[#allocation5 + $0x58] sm:$0xff]
    %v90 = vld [vmem:[#allocation5 + $0x60] sm:$0xff]
    %v91 = vld [vmem:[#allocation5 + $0x68] sm:$0xff]
    %v92 = vld [vmem:[#allocation5 + $0x70] sm:$0xff]
    %v93 = vld [vmem:[#allocation5 + $0x78] sm:$0xff]
    %vm94 = vcmask 523264
    %v95 = vsel %vm94, %v78, 0.0
    %96 = vadd.xlane.f32.xlu0 %v95
    %v97 = vpop.xlane.xlu0 %96
    %v98 = vsel %vm94, %v79, 0.0
    %99 = vadd.xlane.f32.xlu0 %v98
    %v100 = vpop.xlane.xlu0 %99
    %v101 = vsel %vm94, %v80, 0.0
    %102 = vadd.xlane.f32.xlu0 %v101
    %v103 = vpop.xlane.xlu0 %102
    %v104 = vsel %vm94, %v81, 0.0
    %105 = vadd.xlane.f32.xlu0 %v104
    %v106 = vpop.xlane.xlu0 %105
    %v107 = vsel %vm94, %v82, 0.0
    %108 = vadd.xlane.f32.xlu0 %v107
    %v109 = vpop.xlane.xlu0 %108
    %v110 = vsel %vm94, %v83, 0.0
    %111 = vadd.xlane.f32.xlu0 %v110
    %v112 = vpop.xlane.xlu0 %111
    %v113 = vsel %vm94, %v84, 0.0
    %114 = vadd.xlane.f32.xlu0 %v113
    %v115 = vpop.xlane.xlu0 %114
    %v116 = vsel %vm94, %v85, 0.0
    %117 = vadd.xlane.f32.xlu0 %v116
    %v118 = vpop.xlane.xlu0 %117
    %v119 = vsel %vm94, %v86, 0.0
    %120 = vadd.xlane.f32.xlu0 %v119
    %v121 = vpop.xlane.xlu0 %120
    %v122 = vsel %vm94, %v87, 0.0
    %123 = vadd.xlane.f32.xlu0 %v122
    %v124 = vpop.xlane.xlu0 %123
    %v125 = vsel %vm94, %v88, 0.0
    %126 = vadd.xlane.f32.xlu0 %v125
    %v127 = vpop.xlane.xlu0 %126
    %v128 = vsel %vm94, %v89, 0.0
    %129 = vadd.xlane.f32.xlu0 %v128
    %v130 = vpop.xlane.xlu0 %129
    %v131 = vsel %vm94, %v90, 0.0
    %132 = vadd.xlane.f32.xlu0 %v131
    %v133 = vpop.xlane.xlu0 %132
    %v134 = vsel %vm94, %v91, 0.0
    %135 = vadd.xlane.f32.xlu0 %v134
    %v136 = vpop.xlane.xlu0 %135
    %v137 = vsel %vm94, %v92, 0.0
    %138 = vadd.xlane.f32.xlu0 %v137
    %v139 = vpop.xlane.xlu0 %138
    %v140 = vsel %vm94, %v93, 0.0
    %141 = vadd.xlane.f32.xlu0 %v140
    %v142 = vpop.xlane.xlu0 %141
    %v143 = vrcp.pop 64.0
    %v144 = vmul.f32 %v97, %v143
    %v145 = vmul.f32 %v100, %v143
    %v146 = vmul.f32 %v103, %v143
    %v147 = vmul.f32 %v106, %v143
    %v148 = vmul.f32 %v109, %v143
    %v149 = vmul.f32 %v112, %v143
    %v150 = vmul.f32 %v115, %v143
    %v151 = vmul.f32 %v118, %v143
    %v152 = vmul.f32 %v121, %v143
    %v153 = vmul.f32 %v124, %v143
    %v154 = vmul.f32 %v127, %v143
    %v155 = vmul.f32 %v130, %v143
    %v156 = vmul.f32 %v133, %v143
    %v157 = vmul.f32 %v136, %v143
    %v158 = vmul.f32 %v139, %v143
    %v159 = vmul.f32 %v142, %v143
    %v160 = vsub.f32 %v78, %v144
    %v161 = vsub.f32 %v79, %v145
    %v162 = vsub.f32 %v80, %v146
    %v163 = vsub.f32 %v81, %v147
    %v164 = vsub.f32 %v82, %v148
    %v165 = vsub.f32 %v83, %v149
    %v166 = vsub.f32 %v84, %v150
    %v167 = vsub.f32 %v85, %v151
    %v168 = vsub.f32 %v86, %v152
    %v169 = vsub.f32 %v87, %v153
    %v170 = vsub.f32 %v88, %v154
    %v171 = vsub.f32 %v89, %v155
    %v172 = vsub.f32 %v90, %v156
    %v173 = vsub.f32 %v91, %v157
    %v174 = vsub.f32 %v92, %v158
    %v175 = vsub.f32 %v93, %v159
    %v176 = vmul.f32 %v160, %v160
    %v177 = vmul.f32 %v161, %v161
    %v178 = vmul.f32 %v162, %v162
    %v179 = vmul.f32 %v163, %v163
    %v180 = vmul.f32 %v164, %v164
    %v181 = vmul.f32 %v165, %v165
    %v182 = vmul.f32 %v166, %v166
    %v183 = vmul.f32 %v167, %v167
    %v184 = vmul.f32 %v168, %v168
    %v185 = vmul.f32 %v169, %v169
    %v186 = vmul.f32 %v170, %v170
    %v187 = vmul.f32 %v171, %v171
    %v188 = vmul.f32 %v172, %v172
    %v189 = vmul.f32 %v173, %v173
    %v190 = vmul.f32 %v174, %v174
    %v191 = vmul.f32 %v175, %v175
    %v192 = vsel %vm94, %v176, 0.0
    %193 = vadd.xlane.f32.xlu0 %v192
    %v194 = vpop.xlane.xlu0 %193
    %v195 = vsel %vm94, %v177, 0.0
    %196 = vadd.xlane.f32.xlu0 %v195
    %v197 = vpop.xlane.xlu0 %196
    %v198 = vsel %vm94, %v178, 0.0
    %199 = vadd.xlane.f32.xlu0 %v198
    %v200 = vpop.xlane.xlu0 %199
    %v201 = vsel %vm94, %v179, 0.0
    %202 = vadd.xlane.f32.xlu0 %v201
    %v203 = vpop.xlane.xlu0 %202
    %v204 = vsel %vm94, %v180, 0.0
    %205 = vadd.xlane.f32.xlu0 %v204
    %v206 = vpop.xlane.xlu0 %205
    %v207 = vsel %vm94, %v181, 0.0
    %208 = vadd.xlane.f32.xlu0 %v207
    %v209 = vpop.xlane.xlu0 %208
    %v210 = vsel %vm94, %v182, 0.0
    %211 = vadd.xlane.f32.xlu0 %v210
    %v212 = vpop.xlane.xlu0 %211
    %v213 = vsel %vm94, %v183, 0.0
    %214 = vadd.xlane.f32.xlu0 %v213
    %v215 = vpop.xlane.xlu0 %214
    %v216 = vsel %vm94, %v184, 0.0
    %217 = vadd.xlane.f32.xlu0 %v216
    %v218 = vpop.xlane.xlu0 %217
    %v219 = vsel %vm94, %v185, 0.0
    %220 = vadd.xlane.f32.xlu0 %v219
    %v221 = vpop.xlane.xlu0 %220
    %v222 = vsel %vm94, %v186, 0.0
    %223 = vadd.xlane.f32.xlu0 %v222
    %v224 = vpop.xlane.xlu0 %223
    %v225 = vsel %vm94, %v187, 0.0
    %226 = vadd.xlane.f32.xlu0 %v225
    %v227 = vpop.xlane.xlu0 %226
    %v228 = vsel %vm94, %v188, 0.0
    %229 = vadd.xlane.f32.xlu0 %v228
    %v230 = vpop.xlane.xlu0 %229
    %v231 = vsel %vm94, %v189, 0.0
    %232 = vadd.xlane.f32.xlu0 %v231
    %v233 = vpop.xlane.xlu0 %232
    %v234 = vsel %vm94, %v190, 0.0
    %235 = vadd.xlane.f32.xlu0 %v234
    %v236 = vpop.xlane.xlu0 %235
    %v237 = vsel %vm94, %v191, 0.0
    %238 = vadd.xlane.f32.xlu0 %v237
    %v239 = vpop.xlane.xlu0 %238
    %v240 = vmul.f32 %v194, %v143
    %v241 = vmul.f32 %v197, %v143
    %v242 = vmul.f32 %v200, %v143
    %v243 = vmul.f32 %v203, %v143
    %v244 = vmul.f32 %v206, %v143
    %v245 = vmul.f32 %v209, %v143
    %v246 = vmul.f32 %v212, %v143
    %v247 = vmul.f32 %v215, %v143
    %v248 = vmul.f32 %v218, %v143
    %v249 = vmul.f32 %v221, %v143
    %v250 = vmul.f32 %v224, %v143
    %v251 = vmul.f32 %v227, %v143
    %v252 = vmul.f32 %v230, %v143
    %v253 = vmul.f32 %v233, %v143
    %v254 = vmul.f32 %v236, %v143
    %v255 = vmul.f32 %v239, %v143
    %v256 = vadd.f32 %v240, 1e-06
    %v257 = vadd.f32 %v241, 1e-06
    %v258 = vadd.f32 %v242, 1e-06
    %v259 = vadd.f32 %v243, 1e-06
    %v260 = vadd.f32 %v244, 1e-06
    %v261 = vadd.f32 %v245, 1e-06
    %v262 = vadd.f32 %v246, 1e-06
    %v263 = vadd.f32 %v247, 1e-06
    %v264 = vadd.f32 %v248, 1e-06
    %v265 = vadd.f32 %v249, 1e-06
    %v266 = vadd.f32 %v250, 1e-06
    %v267 = vadd.f32 %v251, 1e-06
    %v268 = vadd.f32 %v252, 1e-06
    %v269 = vadd.f32 %v253, 1e-06
    %v270 = vadd.f32 %v254, 1e-06
    %v271 = vadd.f32 %v255, 1e-06
    %v272 = vrsqrt.pop %v256
    %v273 = vrsqrt.pop %v257
    %v274 = vrsqrt.pop %v258
    %v275 = vrsqrt.pop %v259
    %v276 = vrsqrt.pop %v260
    %v277 = vrsqrt.pop %v261
    %v278 = vrsqrt.pop %v262
    %v279 = vrsqrt.pop %v263
    %v280 = vrsqrt.pop %v264
    %v281 = vrsqrt.pop %v265
    %v282 = vrsqrt.pop %v266
    %v283 = vrsqrt.pop %v267
    %v284 = vrsqrt.pop %v268
    %v285 = vrsqrt.pop %v269
    %v286 = vrsqrt.pop %v270
    %v287 = vrsqrt.pop %v271
    %v288 = vmul.f32 %v160, %v272
    %v289 = vmul.f32 %v161, %v273
    %v290 = vmul.f32 %v162, %v274
    %v291 = vmul.f32 %v163, %v275
    %v292 = vmul.f32 %v164, %v276
    %v293 = vmul.f32 %v165, %v277
    %v294 = vmul.f32 %v166, %v278
    %v295 = vmul.f32 %v167, %v279
    %v296 = vmul.f32 %v168, %v280
    %v297 = vmul.f32 %v169, %v281
    %v298 = vmul.f32 %v170, %v282
    %v299 = vmul.f32 %v171, %v283
    %v300 = vmul.f32 %v172, %v284
    %v301 = vmul.f32 %v173, %v285
    %v302 = vmul.f32 %v174, %v286
    %v303 = vmul.f32 %v175, %v287
    %v304 = vld [vmem:[%s2] sm:$0x1]
    %v306 = vlaneseq
    %v307 = vshrl.u32 %v306, 7
    %v308 = vsub.s32 0, %v307
    %v309 = vrot.slane %v304, %v308
    %v311 = vmul.f32 %v288, %v309
    %v312 = vmul.f32 %v289, %v309
    %v313 = vmul.f32 %v290, %v309
    %v314 = vmul.f32 %v291, %v309
    %v315 = vmul.f32 %v292, %v309
    %v316 = vmul.f32 %v293, %v309
    %v317 = vmul.f32 %v294, %v309
    %v318 = vmul.f32 %v295, %v309
    %v319 = vmul.f32 %v296, %v309
    %v320 = vmul.f32 %v297, %v309
    %v321 = vmul.f32 %v298, %v309
    %v322 = vmul.f32 %v299, %v309
    %v323 = vmul.f32 %v300, %v309
    %v324 = vmul.f32 %v301, %v309
    %v325 = vmul.f32 %v302, %v309
    %v326 = vmul.f32 %v303, %v309
    %v327 = vadd.f32 %v78, %v311
    %v328 = vadd.f32 %v79, %v312
    %v329 = vadd.f32 %v80, %v313
    %v330 = vadd.f32 %v81, %v314
    %v331 = vadd.f32 %v82, %v315
    %v332 = vadd.f32 %v83, %v316
    %v333 = vadd.f32 %v84, %v317
    %v334 = vadd.f32 %v85, %v318
    %v335 = vadd.f32 %v86, %v319
    %v336 = vadd.f32 %v87, %v320
    %v337 = vadd.f32 %v88, %v321
    %v338 = vadd.f32 %v89, %v322
    %v339 = vadd.f32 %v90, %v323
    %v340 = vadd.f32 %v91, %v324
    %v341 = vadd.f32 %v92, %v325
    %v342 = vadd.f32 %v93, %v326
    %v343 = vsel %vm94, %v327, 0.0
    %344 = vadd.xlane.f32.xlu0 %v343
    %v345 = vpop.xlane.xlu0 %344
    %v346 = vsel %vm94, %v328, 0.0
    %347 = vadd.xlane.f32.xlu0 %v346
    %v348 = vpop.xlane.xlu0 %347
    %v349 = vsel %vm94, %v329, 0.0
    %350 = vadd.xlane.f32.xlu0 %v349
    %v351 = vpop.xlane.xlu0 %350
    %v352 = vsel %vm94, %v330, 0.0
    %353 = vadd.xlane.f32.xlu0 %v352
    %v354 = vpop.xlane.xlu0 %353
    %v355 = vsel %vm94, %v331, 0.0
    %356 = vadd.xlane.f32.xlu0 %v355
    %v357 = vpop.xlane.xlu0 %356
    %v358 = vsel %vm94, %v332, 0.0
    %359 = vadd.xlane.f32.xlu0 %v358
    %v360 = vpop.xlane.xlu0 %359
    %v361 = vsel %vm94, %v333, 0.0
    %362 = vadd.xlane.f32.xlu0 %v361
    %v363 = vpop.xlane.xlu0 %362
    %v364 = vsel %vm94, %v334, 0.0
    %365 = vadd.xlane.f32.xlu0 %v364
    %v366 = vpop.xlane.xlu0 %365
    %v367 = vsel %vm94, %v335, 0.0
    %368 = vadd.xlane.f32.xlu0 %v367
    %v369 = vpop.xlane.xlu0 %368
    %v370 = vsel %vm94, %v336, 0.0
    %371 = vadd.xlane.f32.xlu0 %v370
    %v372 = vpop.xlane.xlu0 %371
    %v373 = vsel %vm94, %v337, 0.0
    %374 = vadd.xlane.f32.xlu0 %v373
    %v375 = vpop.xlane.xlu0 %374
    %v376 = vsel %vm94, %v338, 0.0
    %377 = vadd.xlane.f32.xlu0 %v376
    %v378 = vpop.xlane.xlu0 %377
    %v379 = vsel %vm94, %v339, 0.0
    %380 = vadd.xlane.f32.xlu0 %v379
    %v381 = vpop.xlane.xlu0 %380
    %v382 = vsel %vm94, %v340, 0.0
    %383 = vadd.xlane.f32.xlu0 %v382
    %v384 = vpop.xlane.xlu0 %383
    %v385 = vsel %vm94, %v341, 0.0
    %386 = vadd.xlane.f32.xlu0 %v385
    %v387 = vpop.xlane.xlu0 %386
    %v388 = vsel %vm94, %v342, 0.0
    %389 = vadd.xlane.f32.xlu0 %v388
    %v390 = vpop.xlane.xlu0 %389
    %v391 = vmul.f32 %v345, %v143
    %v392 = vmul.f32 %v348, %v143
    %v393 = vmul.f32 %v351, %v143
    %v394 = vmul.f32 %v354, %v143
    %v395 = vmul.f32 %v357, %v143
    %v396 = vmul.f32 %v360, %v143
    %v397 = vmul.f32 %v363, %v143
    %v398 = vmul.f32 %v366, %v143
    %v399 = vmul.f32 %v369, %v143
    %v400 = vmul.f32 %v372, %v143
    %v401 = vmul.f32 %v375, %v143
    %v402 = vmul.f32 %v378, %v143
    %v403 = vmul.f32 %v381, %v143
    %v404 = vmul.f32 %v384, %v143
    %v405 = vmul.f32 %v387, %v143
    %v406 = vmul.f32 %v390, %v143
    %v407 = vsub.f32 %v327, %v391
    %v408 = vsub.f32 %v328, %v392
    %v409 = vsub.f32 %v329, %v393
    %v410 = vsub.f32 %v330, %v394
    %v411 = vsub.f32 %v331, %v395
    %v412 = vsub.f32 %v332, %v396
    %v413 = vsub.f32 %v333, %v397
    %v414 = vsub.f32 %v334, %v398
    %v415 = vsub.f32 %v335, %v399
    %v416 = vsub.f32 %v336, %v400
    %v417 = vsub.f32 %v337, %v401
    %v418 = vsub.f32 %v338, %v402
    %v419 = vsub.f32 %v339, %v403
    %v420 = vsub.f32 %v340, %v404
    %v421 = vsub.f32 %v341, %v405
    %v422 = vsub.f32 %v342, %v406
    %v423 = vmul.f32 %v407, %v407
    %v424 = vmul.f32 %v408, %v408
    %v425 = vmul.f32 %v409, %v409
    %v426 = vmul.f32 %v410, %v410
    %v427 = vmul.f32 %v411, %v411
    %v428 = vmul.f32 %v412, %v412
    %v429 = vmul.f32 %v413, %v413
    %v430 = vmul.f32 %v414, %v414
    %v431 = vmul.f32 %v415, %v415
    %v432 = vmul.f32 %v416, %v416
    %v433 = vmul.f32 %v417, %v417
    %v434 = vmul.f32 %v418, %v418
    %v435 = vmul.f32 %v419, %v419
    %v436 = vmul.f32 %v420, %v420
    %v437 = vmul.f32 %v421, %v421
    %v438 = vmul.f32 %v422, %v422
    %v439 = vsel %vm94, %v423, 0.0
    %440 = vadd.xlane.f32.xlu0 %v439
    %v441 = vpop.xlane.xlu0 %440
    %v442 = vsel %vm94, %v424, 0.0
    %443 = vadd.xlane.f32.xlu0 %v442
    %v444 = vpop.xlane.xlu0 %443
    %v445 = vsel %vm94, %v425, 0.0
    %446 = vadd.xlane.f32.xlu0 %v445
    %v447 = vpop.xlane.xlu0 %446
    %v448 = vsel %vm94, %v426, 0.0
    %449 = vadd.xlane.f32.xlu0 %v448
    %v450 = vpop.xlane.xlu0 %449
    %v451 = vsel %vm94, %v427, 0.0
    %452 = vadd.xlane.f32.xlu0 %v451
    %v453 = vpop.xlane.xlu0 %452
    %v454 = vsel %vm94, %v428, 0.0
    %455 = vadd.xlane.f32.xlu0 %v454
    %v456 = vpop.xlane.xlu0 %455
    %v457 = vsel %vm94, %v429, 0.0
    %458 = vadd.xlane.f32.xlu0 %v457
    %v459 = vpop.xlane.xlu0 %458
    %v460 = vsel %vm94, %v430, 0.0
    %461 = vadd.xlane.f32.xlu0 %v460
    %v462 = vpop.xlane.xlu0 %461
    %v463 = vsel %vm94, %v431, 0.0
    %464 = vadd.xlane.f32.xlu0 %v463
    %v465 = vpop.xlane.xlu0 %464
    %v466 = vsel %vm94, %v432, 0.0
    %467 = vadd.xlane.f32.xlu0 %v466
    %v468 = vpop.xlane.xlu0 %467
    %v469 = vsel %vm94, %v433, 0.0
    %470 = vadd.xlane.f32.xlu0 %v469
    %v471 = vpop.xlane.xlu0 %470
    %v472 = vsel %vm94, %v434, 0.0
    %473 = vadd.xlane.f32.xlu0 %v472
    %v474 = vpop.xlane.xlu0 %473
    %v475 = vsel %vm94, %v435, 0.0
    %476 = vadd.xlane.f32.xlu0 %v475
    %v477 = vpop.xlane.xlu0 %476
    %v478 = vsel %vm94, %v436, 0.0
    %479 = vadd.xlane.f32.xlu0 %v478
    %v480 = vpop.xlane.xlu0 %479
    %v481 = vsel %vm94, %v437, 0.0
    %482 = vadd.xlane.f32.xlu0 %v481
    %v483 = vpop.xlane.xlu0 %482
    %v484 = vsel %vm94, %v438, 0.0
    %485 = vadd.xlane.f32.xlu0 %v484
    %v486 = vpop.xlane.xlu0 %485
    %v487 = vmul.f32 %v441, %v143
    %v488 = vmul.f32 %v444, %v143
    %v489 = vmul.f32 %v447, %v143
    %v490 = vmul.f32 %v450, %v143
    %v491 = vmul.f32 %v453, %v143
    %v492 = vmul.f32 %v456, %v143
    %v493 = vmul.f32 %v459, %v143
    %v494 = vmul.f32 %v462, %v143
    %v495 = vmul.f32 %v465, %v143
    %v496 = vmul.f32 %v468, %v143
    %v497 = vmul.f32 %v471, %v143
    %v498 = vmul.f32 %v474, %v143
    %v499 = vmul.f32 %v477, %v143
    %v500 = vmul.f32 %v480, %v143
    %v501 = vmul.f32 %v483, %v143
    %v502 = vmul.f32 %v486, %v143
    %v503 = vadd.f32 %v487, 1e-06
    %v504 = vadd.f32 %v488, 1e-06
    %v505 = vadd.f32 %v489, 1e-06
    %v506 = vadd.f32 %v490, 1e-06
    %v507 = vadd.f32 %v491, 1e-06
    %v508 = vadd.f32 %v492, 1e-06
    %v509 = vadd.f32 %v493, 1e-06
    %v510 = vadd.f32 %v494, 1e-06
    %v511 = vadd.f32 %v495, 1e-06
    %v512 = vadd.f32 %v496, 1e-06
    %v513 = vadd.f32 %v497, 1e-06
    %v514 = vadd.f32 %v498, 1e-06
    %v515 = vadd.f32 %v499, 1e-06
    %v516 = vadd.f32 %v500, 1e-06
    %v517 = vadd.f32 %v501, 1e-06
    %v518 = vadd.f32 %v502, 1e-06
    %v519 = vrsqrt.pop %v503
    %v520 = vrsqrt.pop %v504
    %v521 = vrsqrt.pop %v505
    %v522 = vrsqrt.pop %v506
    %v523 = vrsqrt.pop %v507
    %v524 = vrsqrt.pop %v508
    %v525 = vrsqrt.pop %v509
    %v526 = vrsqrt.pop %v510
    %v527 = vrsqrt.pop %v511
    %v528 = vrsqrt.pop %v512
    %v529 = vrsqrt.pop %v513
    %v530 = vrsqrt.pop %v514
    %v531 = vrsqrt.pop %v515
    %v532 = vrsqrt.pop %v516
    %v533 = vrsqrt.pop %v517
    %v534 = vrsqrt.pop %v518
    %v535 = vmul.f32 %v407, %v519
    %v536 = vmul.f32 %v408, %v520
    %v537 = vmul.f32 %v409, %v521
    %v538 = vmul.f32 %v410, %v522
    %v539 = vmul.f32 %v411, %v523
    %v540 = vmul.f32 %v412, %v524
    %v541 = vmul.f32 %v413, %v525
    %v542 = vmul.f32 %v414, %v526
    %v543 = vmul.f32 %v415, %v527
    %v544 = vmul.f32 %v416, %v528
    %v545 = vmul.f32 %v417, %v529
    %v546 = vmul.f32 %v418, %v530
    %v547 = vmul.f32 %v419, %v531
    %v548 = vmul.f32 %v420, %v532
    %v549 = vmul.f32 %v421, %v533
    %v550 = vmul.f32 %v422, %v534
    %v551 = vld [vmem:[%s3] sm:$0x1]
    %v553 = vlaneseq
    %v554 = vshrl.u32 %v553, 7
    %v555 = vsub.s32 0, %v554
    %v556 = vrot.slane %v551, %v555
    %v558 = vmul.f32 %v535, %v556
    %v559 = vmul.f32 %v536, %v556
    %v560 = vmul.f32 %v537, %v556
    %v561 = vmul.f32 %v538, %v556
    %v562 = vmul.f32 %v539, %v556
    %v563 = vmul.f32 %v540, %v556
    %v564 = vmul.f32 %v541, %v556
    %v565 = vmul.f32 %v542, %v556
    %v566 = vmul.f32 %v543, %v556
    %v567 = vmul.f32 %v544, %v556
    %v568 = vmul.f32 %v545, %v556
    %v569 = vmul.f32 %v546, %v556
    %v570 = vmul.f32 %v547, %v556
    %v571 = vmul.f32 %v548, %v556
    %v572 = vmul.f32 %v549, %v556
    %v573 = vmul.f32 %v550, %v556
    %v574 = vpack.c.bf16 %v559, %v558
    %v575 = vpack.c.bf16 %v561, %v560
    %v576 = vpack.c.bf16 %v563, %v562
    %v577 = vpack.c.bf16 %v565, %v564
    %v578 = vpack.c.bf16 %v567, %v566
    %v579 = vpack.c.bf16 %v569, %v568
    %v580 = vpack.c.bf16 %v571, %v570
    %v581 = vpack.c.bf16 %v573, %v572
    %v582 = vld [vmem:[#allocation6] sm:$0xff]
    %v583 = vld [vmem:[#allocation6 + $0x8] sm:$0xff]
    %v584 = vld [vmem:[#allocation6 + $0x10] sm:$0xff]
    %v585 = vld [vmem:[#allocation6 + $0x18] sm:$0xff]
    %v586 = vld [vmem:[#allocation6 + $0x20] sm:$0xff]
    %v587 = vld [vmem:[#allocation6 + $0x28] sm:$0xff]
    %v588 = vld [vmem:[#allocation6 + $0x30] sm:$0xff]
    %v589 = vld [vmem:[#allocation6 + $0x38] sm:$0xff]
    %v598 = vunpack.c.l.b16 %v582
    %v599 = vunpack.c.h.b16 %v582
    %v600 = vunpack.c.l.b16 %v583
    %v601 = vunpack.c.h.b16 %v583
    %v602 = vunpack.c.l.b16 %v584
    %v603 = vunpack.c.h.b16 %v584
    %v604 = vunpack.c.l.b16 %v585
    %v605 = vunpack.c.h.b16 %v585
    %v606 = vunpack.c.l.b16 %v586
    %v607 = vunpack.c.h.b16 %v586
    %v608 = vunpack.c.l.b16 %v587
    %v609 = vunpack.c.h.b16 %v587
    %v610 = vunpack.c.l.b16 %v588
    %v611 = vunpack.c.h.b16 %v588
    %v612 = vunpack.c.l.b16 %v589
    %v613 = vunpack.c.h.b16 %v589
    %v614 = vpack.c.b16 %v600, %v598
    %v615 = vpack.c.b16 %v601, %v599
    %v616 = vpack.c.b16 %v604, %v602
    %v617 = vpack.c.b16 %v605, %v603
    %v618 = vpack.c.b16 %v608, %v606
    %v619 = vpack.c.b16 %v609, %v607
    %v620 = vpack.c.b16 %v612, %v610
    %v621 = vpack.c.b16 %v613, %v611
    %v631 = vsel %vm94, %v574, 0
    %v634 = vsel %vm94, %v575, 0
    %v637 = vsel %vm94, %v576, 0
    %v640 = vsel %vm94, %v577, 0
    %v643 = vsel %vm94, %v578, 0
    %v646 = vsel %vm94, %v579, 0
    %v649 = vsel %vm94, %v580, 0
    %v652 = vsel %vm94, %v581, 0
    %654 = vmatprep.subr.bf16.mxu0 0
    %655 = vmatpush1.bf16.msra.mxu0 0
    %656 = vmatprep.subr.bf16.mxu0 0
    %657 = vmatpush1.bf16.msra.mxu0 0
    %658 = vmatprep.subr.bf16.mxu0 0
    %659 = vmatpush1.bf16.msra.mxu0 0
    %660 = vmatprep.subr.bf16.mxu0 0
    %661 = vmatpush1.bf16.msra.mxu0 0
    %662 = vmatprep.subr.bf16.mxu0 %v621
    %663 = vmatpush1.bf16.msra.mxu0 %v620
    %664 = vmatprep.subr.bf16.mxu0 %v619
    %665 = vmatpush1.bf16.msra.mxu0 %v618
    %666 = vmatprep.subr.bf16.mxu0 %v617
    %667 = vmatpush1.bf16.msra.mxu0 %v616
    %668 = vmatprep.subr.bf16.mxu0 %v615
    %669 = vmatpush1.bf16.msra.mxu0 %v614
    %670 = vmatprep.subr.bf16.mxu0 0
    %671 = vmatpush2.bf16.msra.mxu0 0
    %672 = vmatprep.subr.bf16.mxu0 0
    %673 = vmatpush2.bf16.msra.mxu0 0
    %674 = vmatprep.subr.bf16.mxu0 0
    %675 = vmatpush2.bf16.msra.mxu0 0
    %676 = vmatprep.subr.bf16.mxu0 0
    %677 = vmatpush2.bf16.msra.mxu0 0
    %678 = vmatprep.subr.bf16.mxu0 0
    %679 = vmatpush2.bf16.msra.mxu0 0
    %680 = vmatprep.subr.bf16.mxu0 0
    %681 = vmatpush2.bf16.msra.mxu0 0
    %682 = vmatprep.subr.bf16.mxu0 0
    %683 = vmatpush2.bf16.msra.mxu0 0
    %684 = vmatprep.subr.bf16.mxu0 0
    %685 = vmatpush2.bf16.msra.mxu0 0
    %686 = vmatprep.mubr.bf16.mxu0 0
    %687 = vmatmul.mubr.bf16.gmra.mxu0 %v631
    %v688 = vpop.f32.mrf.mxu0
    %v689 = vadd.f32 0.0, %v688
    %v690 = vpop.f32.mrf.mxu0
    %v691 = vadd.f32 0.0, %v690
    %v692 = vpop.f32.mrf.mxu0
    %v693 = vadd.f32 0.0, %v692
    %v694 = vpop.f32.mrf.mxu0
    %v695 = vadd.f32 0.0, %v694
    %696 = vmatprep.mubr.bf16.mxu0 0
    %697 = vmatmul.mubr.bf16.gmra.mxu0 %v634
    %v698 = vpop.f32.mrf.mxu0
    %v699 = vadd.f32 0.0, %v698
    %v700 = vpop.f32.mrf.mxu0
    %v701 = vadd.f32 0.0, %v700
    %v702 = vpop.f32.mrf.mxu0
    %v703 = vadd.f32 0.0, %v702
    %v704 = vpop.f32.mrf.mxu0
    %v705 = vadd.f32 0.0, %v704
    %706 = vmatprep.mubr.bf16.mxu0 0
    %707 = vmatmul.mubr.bf16.gmra.mxu0 %v637
    %v708 = vpop.f32.mrf.mxu0
    %v709 = vadd.f32 0.0, %v708
    %v710 = vpop.f32.mrf.mxu0
    %v711 = vadd.f32 0.0, %v710
    %v712 = vpop.f32.mrf.mxu0
    %v713 = vadd.f32 0.0, %v712
    %v714 = vpop.f32.mrf.mxu0
    %v715 = vadd.f32 0.0, %v714
    %716 = vmatprep.mubr.bf16.mxu0 0
    %717 = vmatmul.mubr.bf16.gmra.mxu0 %v640
    %v718 = vpop.f32.mrf.mxu0
    %v719 = vadd.f32 0.0, %v718
    %v720 = vpop.f32.mrf.mxu0
    %v721 = vadd.f32 0.0, %v720
    %v722 = vpop.f32.mrf.mxu0
    %v723 = vadd.f32 0.0, %v722
    %v724 = vpop.f32.mrf.mxu0
    %v725 = vadd.f32 0.0, %v724
    %726 = vmatprep.mubr.bf16.mxu0 0
    %727 = vmatmul.mubr.bf16.gmra.mxu0 %v643
    %v728 = vpop.f32.mrf.mxu0
    %v729 = vadd.f32 0.0, %v728
    %v730 = vpop.f32.mrf.mxu0
    %v731 = vadd.f32 0.0, %v730
    %v732 = vpop.f32.mrf.mxu0
    %v733 = vadd.f32 0.0, %v732
    %v734 = vpop.f32.mrf.mxu0
    %v735 = vadd.f32 0.0, %v734
    %736 = vmatprep.mubr.bf16.mxu0 0
    %737 = vmatmul.mubr.bf16.gmra.mxu0 %v646
    %v738 = vpop.f32.mrf.mxu0
    %v739 = vadd.f32 0.0, %v738
    %v740 = vpop.f32.mrf.mxu0
    %v741 = vadd.f32 0.0, %v740
    %v742 = vpop.f32.mrf.mxu0
    %v743 = vadd.f32 0.0, %v742
    %v744 = vpop.f32.mrf.mxu0
    %v745 = vadd.f32 0.0, %v744
    %746 = vmatprep.mubr.bf16.mxu0 0
    %747 = vmatmul.mubr.bf16.gmra.mxu0 %v649
    %v748 = vpop.f32.mrf.mxu0
    %v749 = vadd.f32 0.0, %v748
    %v750 = vpop.f32.mrf.mxu0
    %v751 = vadd.f32 0.0, %v750
    %v752 = vpop.f32.mrf.mxu0
    %v753 = vadd.f32 0.0, %v752
    %v754 = vpop.f32.mrf.mxu0
    %v755 = vadd.f32 0.0, %v754
    %756 = vmatprep.mubr.bf16.mxu0 0
    %757 = vmatmul.mubr.bf16.gmra.mxu0 %v652
    %v758 = vpop.f32.mrf.mxu0
    %v759 = vadd.f32 0.0, %v758
    %v760 = vpop.f32.mrf.mxu0
    %v761 = vadd.f32 0.0, %v760
    %v762 = vpop.f32.mrf.mxu0
    %v763 = vadd.f32 0.0, %v762
    %v764 = vpop.f32.mrf.mxu0
    %v765 = vadd.f32 0.0, %v764
    %766 = vdwg.mxu0
    %v767 = vmax.f32 %v689, 0.0
    %v768 = vmax.f32 %v691, 0.0
    %v769 = vmax.f32 %v693, 0.0
    %v770 = vmax.f32 %v695, 0.0
    %v771 = vmax.f32 %v699, 0.0
    %v772 = vmax.f32 %v701, 0.0
    %v773 = vmax.f32 %v703, 0.0
    %v774 = vmax.f32 %v705, 0.0
    %v775 = vmax.f32 %v709, 0.0
    %v776 = vmax.f32 %v711, 0.0
    %v777 = vmax.f32 %v713, 0.0
    %v778 = vmax.f32 %v715, 0.0
    %v779 = vmax.f32 %v719, 0.0
    %v780 = vmax.f32 %v721, 0.0
    %v781 = vmax.f32 %v723, 0.0
    %v782 = vmax.f32 %v725, 0.0
    %v783 = vmax.f32 %v729, 0.0
    %v784 = vmax.f32 %v731, 0.0
    %v785 = vmax.f32 %v733, 0.0
    %v786 = vmax.f32 %v735, 0.0
    %v787 = vmax.f32 %v739, 0.0
    %v788 = vmax.f32 %v741, 0.0
    %v789 = vmax.f32 %v743, 0.0
    %v790 = vmax.f32 %v745, 0.0
    %v791 = vmax.f32 %v749, 0.0
    %v792 = vmax.f32 %v751, 0.0
    %v793 = vmax.f32 %v753, 0.0
    %v794 = vmax.f32 %v755, 0.0
    %v795 = vmax.f32 %v759, 0.0
    %v796 = vmax.f32 %v761, 0.0
    %v797 = vmax.f32 %v763, 0.0
    %v798 = vmax.f32 %v765, 0.0
    %s799 = sld [smem:[#allocation2]]
    %v800 = vmul.f32 %v767, %v767
    %v801 = vmul.f32 %v768, %v768
    %v802 = vmul.f32 %v769, %v769
    %v803 = vmul.f32 %v770, %v770
    %v804 = vmul.f32 %v771, %v771
    %v805 = vmul.f32 %v772, %v772
    %v806 = vmul.f32 %v773, %v773
    %v807 = vmul.f32 %v774, %v774
    %v808 = vmul.f32 %v775, %v775
    %v809 = vmul.f32 %v776, %v776
    %v810 = vmul.f32 %v777, %v777
    %v811 = vmul.f32 %v778, %v778
    %v812 = vmul.f32 %v779, %v779
    %v813 = vmul.f32 %v780, %v780
    %v814 = vmul.f32 %v781, %v781
    %v815 = vmul.f32 %v782, %v782
    %v816 = vmul.f32 %v783, %v783
    %v817 = vmul.f32 %v784, %v784
    %v818 = vmul.f32 %v785, %v785
    %v819 = vmul.f32 %v786, %v786
    %v820 = vmul.f32 %v787, %v787
    %v821 = vmul.f32 %v788, %v788
    %v822 = vmul.f32 %v789, %v789
    %v823 = vmul.f32 %v790, %v790
    %v824 = vmul.f32 %v791, %v791
    %v825 = vmul.f32 %v792, %v792
    %v826 = vmul.f32 %v793, %v793
    %v827 = vmul.f32 %v794, %v794
    %v828 = vmul.f32 %v795, %v795
    %v829 = vmul.f32 %v796, %v796
    %v830 = vmul.f32 %v797, %v797
    %v831 = vmul.f32 %v798, %v798
    %v832 = vstv %s799
    %v833 = vmul.f32 %v832, %v800
    %v834 = vmul.f32 %v832, %v801
    %v835 = vmul.f32 %v832, %v802
    %v836 = vmul.f32 %v832, %v803
    %v837 = vmul.f32 %v832, %v804
    %v838 = vmul.f32 %v832, %v805
    %v839 = vmul.f32 %v832, %v806
    %v840 = vmul.f32 %v832, %v807
    %v841 = vmul.f32 %v832, %v808
    %v842 = vmul.f32 %v832, %v809
    %v843 = vmul.f32 %v832, %v810
    %v844 = vmul.f32 %v832, %v811
    %v845 = vmul.f32 %v832, %v812
    %v846 = vmul.f32 %v832, %v813
    %v847 = vmul.f32 %v832, %v814
    %v848 = vmul.f32 %v832, %v815
    %v849 = vmul.f32 %v832, %v816
    %v850 = vmul.f32 %v832, %v817
    %v851 = vmul.f32 %v832, %v818
    %v852 = vmul.f32 %v832, %v819
    %v853 = vmul.f32 %v832, %v820
    %v854 = vmul.f32 %v832, %v821
    %v855 = vmul.f32 %v832, %v822
    %v856 = vmul.f32 %v832, %v823
    %v857 = vmul.f32 %v832, %v824
    %v858 = vmul.f32 %v832, %v825
    %v859 = vmul.f32 %v832, %v826
    %v860 = vmul.f32 %v832, %v827
    %v861 = vmul.f32 %v832, %v828
    %v862 = vmul.f32 %v832, %v829
    %v863 = vmul.f32 %v832, %v830
    %v864 = vmul.f32 %v832, %v831
    %s865 = sld [smem:[#allocation2 + $0x1]]
    %v866 = vstv %s865
    %v867 = vadd.f32 %v833, %v866
    %v868 = vadd.f32 %v834, %v866
    %v869 = vadd.f32 %v835, %v866
    %v870 = vadd.f32 %v836, %v866
    %v871 = vadd.f32 %v837, %v866
    %v872 = vadd.f32 %v838, %v866
    %v873 = vadd.f32 %v839, %v866
    %v874 = vadd.f32 %v840, %v866
    %v875 = vadd.f32 %v841, %v866
    %v876 = vadd.f32 %v842, %v866
    %v877 = vadd.f32 %v843, %v866
    %v878 = vadd.f32 %v844, %v866
    %v879 = vadd.f32 %v845, %v866
    %v880 = vadd.f32 %v846, %v866
    %v881 = vadd.f32 %v847, %v866
    %v882 = vadd.f32 %v848, %v866
    %v883 = vadd.f32 %v849, %v866
    %v884 = vadd.f32 %v850, %v866
    %v885 = vadd.f32 %v851, %v866
    %v886 = vadd.f32 %v852, %v866
    %v887 = vadd.f32 %v853, %v866
    %v888 = vadd.f32 %v854, %v866
    %v889 = vadd.f32 %v855, %v866
    %v890 = vadd.f32 %v856, %v866
    %v891 = vadd.f32 %v857, %v866
    %v892 = vadd.f32 %v858, %v866
    %v893 = vadd.f32 %v859, %v866
    %v894 = vadd.f32 %v860, %v866
    %v895 = vadd.f32 %v861, %v866
    %v896 = vadd.f32 %v862, %v866
    %v897 = vadd.f32 %v863, %v866
    %v898 = vadd.f32 %v864, %v866
    %v899 = vpack.c.bf16 %v869, %v867
    %v900 = vpack.c.bf16 %v870, %v868
    %v901 = vpack.c.bf16 %v873, %v871
    %v902 = vpack.c.bf16 %v874, %v872
    %v903 = vpack.c.bf16 %v877, %v875
    %v904 = vpack.c.bf16 %v878, %v876
    %v905 = vpack.c.bf16 %v881, %v879
    %v906 = vpack.c.bf16 %v882, %v880
    %v907 = vpack.c.bf16 %v885, %v883
    %v908 = vpack.c.bf16 %v886, %v884
    %v909 = vpack.c.bf16 %v889, %v887
    %v910 = vpack.c.bf16 %v890, %v888
    %v911 = vpack.c.bf16 %v893, %v891
    %v912 = vpack.c.bf16 %v894, %v892
    %v913 = vpack.c.bf16 %v897, %v895
    %v914 = vpack.c.bf16 %v898, %v896
    %v915 = vld [vmem:[#allocation8] sm:$0xf]
    %v916 = vld [vmem:[#allocation8 + $0x4] sm:$0xf]
    %v917 = vld [vmem:[#allocation8 + $0x8] sm:$0xf]
    %v918 = vld [vmem:[#allocation8 + $0xc] sm:$0xf]
    %v919 = vld [vmem:[#allocation8 + $0x10] sm:$0xf]
    %v920 = vld [vmem:[#allocation8 + $0x14] sm:$0xf]
    %v921 = vld [vmem:[#allocation8 + $0x18] sm:$0xf]
    %v922 = vld [vmem:[#allocation8 + $0x1c] sm:$0xf]
    %v923 = vld [vmem:[#allocation8 + $0x20] sm:$0xf]
    %v924 = vld [vmem:[#allocation8 + $0x24] sm:$0xf]
    %v925 = vld [vmem:[#allocation8 + $0x28] sm:$0xf]
    %v926 = vld [vmem:[#allocation8 + $0x2c] sm:$0xf]
    %v927 = vld [vmem:[#allocation8 + $0x30] sm:$0xf]
    %v928 = vld [vmem:[#allocation8 + $0x34] sm:$0xf]
    %v929 = vld [vmem:[#allocation8 + $0x38] sm:$0xf]
    %v930 = vld [vmem:[#allocation8 + $0x3c] sm:$0xf]
    %v931 = vld [vmem:[#allocation8 + $0x40] sm:$0xf]
    %v932 = vld [vmem:[#allocation8 + $0x44] sm:$0xf]
    %v933 = vld [vmem:[#allocation8 + $0x48] sm:$0xf]
    %v934 = vld [vmem:[#allocation8 + $0x4c] sm:$0xf]
    %v935 = vld [vmem:[#allocation8 + $0x50] sm:$0xf]
    %v936 = vld [vmem:[#allocation8 + $0x54] sm:$0xf]
    %v937 = vld [vmem:[#allocation8 + $0x58] sm:$0xf]
    %v938 = vld [vmem:[#allocation8 + $0x5c] sm:$0xf]
    %v939 = vld [vmem:[#allocation8 + $0x60] sm:$0xf]
    %v940 = vld [vmem:[#allocation8 + $0x64] sm:$0xf]
    %v941 = vld [vmem:[#allocation8 + $0x68] sm:$0xf]
    %v942 = vld [vmem:[#allocation8 + $0x6c] sm:$0xf]
    %v943 = vld [vmem:[#allocation8 + $0x70] sm:$0xf]
    %v944 = vld [vmem:[#allocation8 + $0x74] sm:$0xf]
    %v945 = vld [vmem:[#allocation8 + $0x78] sm:$0xf]
    %v946 = vld [vmem:[#allocation8 + $0x7c] sm:$0xf]
    %v979 = vunpack.c.l.b16 %v915
    %v980 = vunpack.c.l.b16 %v916
    %v981 = vunpack.c.l.b16 %v917
    %v982 = vunpack.c.l.b16 %v918
    %v983 = vunpack.c.l.b16 %v919
    %v984 = vunpack.c.l.b16 %v920
    %v985 = vunpack.c.l.b16 %v921
    %v986 = vunpack.c.l.b16 %v922
    %v987 = vunpack.c.l.b16 %v923
    %v988 = vunpack.c.l.b16 %v924
    %v989 = vunpack.c.l.b16 %v925
    %v990 = vunpack.c.l.b16 %v926
    %v991 = vunpack.c.l.b16 %v927
    %v992 = vunpack.c.l.b16 %v928
    %v993 = vunpack.c.l.b16 %v929
    %v994 = vunpack.c.l.b16 %v930
    %v995 = vunpack.c.l.b16 %v931
    %v996 = vunpack.c.l.b16 %v932
    %v997 = vunpack.c.l.b16 %v933
    %v998 = vunpack.c.l.b16 %v934
    %v999 = vunpack.c.l.b16 %v935
    %v1000 = vunpack.c.l.b16 %v936
    %v1001 = vunpack.c.l.b16 %v937
    %v1002 = vunpack.c.l.b16 %v938
    %v1003 = vunpack.c.l.b16 %v939
    %v1004 = vunpack.c.l.b16 %v940
    %v1005 = vunpack.c.l.b16 %v941
    %v1006 = vunpack.c.l.b16 %v942
    %v1007 = vunpack.c.l.b16 %v943
    %v1008 = vunpack.c.l.b16 %v944
    %v1009 = vunpack.c.l.b16 %v945
    %v1010 = vunpack.c.l.b16 %v946
    %v1011 = vpack.c.b16 %v980, %v979
    %v1012 = vpack.c.b16 %v982, %v981
    %v1013 = vpack.c.b16 %v984, %v983
    %v1014 = vpack.c.b16 %v986, %v985
    %v1015 = vpack.c.b16 %v988, %v987
    %v1016 = vpack.c.b16 %v990, %v989
    %v1017 = vpack.c.b16 %v992, %v991
    %v1018 = vpack.c.b16 %v994, %v993
    %v1019 = vpack.c.b16 %v996, %v995
    %v1020 = vpack.c.b16 %v998, %v997
    %v1021 = vpack.c.b16 %v1000, %v999
    %v1022 = vpack.c.b16 %v1002, %v1001
    %v1023 = vpack.c.b16 %v1004, %v1003
    %v1024 = vpack.c.b16 %v1006, %v1005
    %v1025 = vpack.c.b16 %v1008, %v1007
    %v1026 = vpack.c.b16 %v1010, %v1009
    %1043 = vmatprep.subr.bf16.mxu0 0
    %1044 = vmatpush1.bf16.msra.mxu0 %v1018
    %1045 = vmatprep.subr.bf16.mxu0 0
    %1046 = vmatpush1.bf16.msra.mxu0 %v1017
    %1047 = vmatprep.subr.bf16.mxu0 0
    %1048 = vmatpush1.bf16.msra.mxu0 %v1016
    %1049 = vmatprep.subr.bf16.mxu0 0
    %1050 = vmatpush1.bf16.msra.mxu0 %v1015
    %1051 = vmatprep.subr.bf16.mxu0 0
    %1052 = vmatpush1.bf16.msra.mxu0 %v1014
    %1053 = vmatprep.subr.bf16.mxu0 0
    %1054 = vmatpush1.bf16.msra.mxu0 %v1013
    %1055 = vmatprep.subr.bf16.mxu0 0
    %1056 = vmatpush1.bf16.msra.mxu0 %v1012
    %1057 = vmatprep.subr.bf16.mxu0 0
    %1058 = vmatpush1.bf16.msra.mxu0 %v1011
    %1059 = vmatprep.subr.bf16.mxu0 0
    %1060 = vmatpush2.bf16.msra.mxu0 %v1026
    %1061 = vmatprep.subr.bf16.mxu0 0
    %1062 = vmatpush2.bf16.msra.mxu0 %v1025
    %1063 = vmatprep.subr.bf16.mxu0 0
    %1064 = vmatpush2.bf16.msra.mxu0 %v1024
    %1065 = vmatprep.subr.bf16.mxu0 0
    %1066 = vmatpush2.bf16.msra.mxu0 %v1023
    %1067 = vmatprep.subr.bf16.mxu0 0
    %1068 = vmatpush2.bf16.msra.mxu0 %v1022
    %1069 = vmatprep.subr.bf16.mxu0 0
    %1070 = vmatpush2.bf16.msra.mxu0 %v1021
    %1071 = vmatprep.subr.bf16.mxu0 0
    %1072 = vmatpush2.bf16.msra.mxu0 %v1020
    %1073 = vmatprep.subr.bf16.mxu0 0
    %1074 = vmatpush2.bf16.msra.mxu0 %v1019
    %1075 = vmatprep.mubr.bf16.mxu0 %v900
    %1076 = vmatmul.mubr.bf16.gmra.mxu0 %v899
    %v1077 = vpop.f32.mrf.mxu0
    %v1078 = vadd.f32 0.0, %v1077
    %v1079 = vpop.f32.mrf.mxu0
    %v1080 = vpop.f32.mrf.mxu0
    %v1081 = vadd.f32 0.0, %v1080
    %v1082 = vpop.f32.mrf.mxu0
    %1083 = vmatprep.mubr.bf16.mxu0 %v902
    %1084 = vmatmul.mubr.bf16.gmra.mxu0 %v901
    %v1085 = vpop.f32.mrf.mxu0
    %v1086 = vadd.f32 0.0, %v1085
    %v1087 = vpop.f32.mrf.mxu0
    %v1088 = vpop.f32.mrf.mxu0
    %v1089 = vadd.f32 0.0, %v1088
    %v1090 = vpop.f32.mrf.mxu0
    %1091 = vmatprep.mubr.bf16.mxu0 %v904
    %1092 = vmatmul.mubr.bf16.gmra.mxu0 %v903
    %v1093 = vpop.f32.mrf.mxu0
    %v1094 = vadd.f32 0.0, %v1093
    %v1095 = vpop.f32.mrf.mxu0
    %v1096 = vpop.f32.mrf.mxu0
    %v1097 = vadd.f32 0.0, %v1096
    %v1098 = vpop.f32.mrf.mxu0
    %1099 = vmatprep.mubr.bf16.mxu0 %v906
    %1100 = vmatmul.mubr.bf16.gmra.mxu0 %v905
    %v1101 = vpop.f32.mrf.mxu0
    %v1102 = vadd.f32 0.0, %v1101
    %v1103 = vpop.f32.mrf.mxu0
    %v1104 = vpop.f32.mrf.mxu0
    %v1105 = vadd.f32 0.0, %v1104
    %v1106 = vpop.f32.mrf.mxu0
    %1107 = vmatprep.mubr.bf16.mxu0 %v908
    %1108 = vmatmul.mubr.bf16.gmra.mxu0 %v907
    %v1109 = vpop.f32.mrf.mxu0
    %v1110 = vadd.f32 0.0, %v1109
    %v1111 = vpop.f32.mrf.mxu0
    %v1112 = vpop.f32.mrf.mxu0
    %v1113 = vadd.f32 0.0, %v1112
    %v1114 = vpop.f32.mrf.mxu0
    %1115 = vmatprep.mubr.bf16.mxu0 %v910
    %1116 = vmatmul.mubr.bf16.gmra.mxu0 %v909
    %v1117 = vpop.f32.mrf.mxu0
    %v1118 = vadd.f32 0.0, %v1117
    %v1119 = vpop.f32.mrf.mxu0
    %v1120 = vpop.f32.mrf.mxu0
    %v1121 = vadd.f32 0.0, %v1120
    %v1122 = vpop.f32.mrf.mxu0
    %1123 = vmatprep.mubr.bf16.mxu0 %v912
    %1124 = vmatmul.mubr.bf16.gmra.mxu0 %v911
    %v1125 = vpop.f32.mrf.mxu0
    %v1126 = vadd.f32 0.0, %v1125
    %v1127 = vpop.f32.mrf.mxu0
    %v1128 = vpop.f32.mrf.mxu0
    %v1129 = vadd.f32 0.0, %v1128
    %v1130 = vpop.f32.mrf.mxu0
    %1131 = vmatprep.mubr.bf16.mxu0 %v914
    %1132 = vmatmul.mubr.bf16.gmra.mxu0 %v913
    %v1133 = vpop.f32.mrf.mxu0
    %v1134 = vadd.f32 0.0, %v1133
    %v1135 = vpop.f32.mrf.mxu0
    %v1136 = vpop.f32.mrf.mxu0
    %v1137 = vadd.f32 0.0, %v1136
    %v1138 = vpop.f32.mrf.mxu0
    %1139 = vdwg.mxu0
    %v1140 = vadd.f32 %v327, %v1078
    %v1141 = vadd.f32 %v328, %v1081
    %v1142 = vadd.f32 %v329, %v1086
    %v1143 = vadd.f32 %v330, %v1089
    %v1144 = vadd.f32 %v331, %v1094
    %v1145 = vadd.f32 %v332, %v1097
    %v1146 = vadd.f32 %v333, %v1102
    %v1147 = vadd.f32 %v334, %v1105
    %v1148 = vadd.f32 %v335, %v1110
    %v1149 = vadd.f32 %v336, %v1113
    %v1150 = vadd.f32 %v337, %v1118
    %v1151 = vadd.f32 %v338, %v1121
    %v1152 = vadd.f32 %v339, %v1126
    %v1153 = vadd.f32 %v340, %v1129
    %v1154 = vadd.f32 %v341, %v1134
    %v1155 = vadd.f32 %v342, %v1137
    %1156 = vst.msk [vmem:[%s6] sm:$0xff] %vm94, %v1140
    %1157 = vst.msk [vmem:[%s6 + $0x8] sm:$0xff] %vm94, %v1141
    %1158 = vst.msk [vmem:[%s6 + $0x10] sm:$0xff] %vm94, %v1142
    %1159 = vst.msk [vmem:[%s6 + $0x18] sm:$0xff] %vm94, %v1143
    %1160 = vst.msk [vmem:[%s6 + $0x20] sm:$0xff] %vm94, %v1144
    %1161 = vst.msk [vmem:[%s6 + $0x28] sm:$0xff] %vm94, %v1145
    %1162 = vst.msk [vmem:[%s6 + $0x30] sm:$0xff] %vm94, %v1146
    %1163 = vst.msk [vmem:[%s6 + $0x38] sm:$0xff] %vm94, %v1147
    %1164 = vst.msk [vmem:[%s6 + $0x40] sm:$0xff] %vm94, %v1148
    %1165 = vst.msk [vmem:[%s6 + $0x48] sm:$0xff] %vm94, %v1149
    %1166 = vst.msk [vmem:[%s6 + $0x50] sm:$0xff] %vm94, %v1150
    %1167 = vst.msk [vmem:[%s6 + $0x58] sm:$0xff] %vm94, %v1151
    %1168 = vst.msk [vmem:[%s6 + $0x60] sm:$0xff] %vm94, %v1152
    %1169 = vst.msk [vmem:[%s6 + $0x68] sm:$0xff] %vm94, %v1153
    %1170 = vst.msk [vmem:[%s6 + $0x70] sm:$0xff] %vm94, %v1154
    %1171 = vst.msk [vmem:[%s6 + $0x78] sm:$0xff] %vm94, %v1155
    // Predicated region
    $region42: #{stage.2} parent=1 // pred_check
      _
    $region43: #{stage.2} parent=1 // pred_check_branch
      %1173 = sbr.rel (0) target = $region45
    $region44: #{stage.2} parent=1 // pred_region
      _
    $region45: #{stage.2} parent=1 // pred_fallthru
      _
    // Predicated region
    $region46: #{stage.2} parent=1 // pred_check
      _
    $region47: #{stage.2} parent=1 // pred_check_branch
      %1175 = sbr.rel (0) target = $region49
    $region48: #{stage.2} parent=1 // pred_region
      _
    $region49: #{stage.2} parent=1 // pred_fallthru
      _
    %1176 = vsyncpa [#allocation3], 1
    %1177 = vsyncpa [#allocation7], 1
    %1178 = vsyncpa [#allocation4], 1

</llo_original>
